<compile_context>
chip_gen: v5e
topology: v5e:2x2
jax: 0.10.0
libtpu: 0.0.40
codegen_flags: <defaults>
</compile_context>

<pallas_src>
import jax
import jax.numpy as jnp
from jax import lax
from jax.experimental import pallas as pl
from jax.experimental.pallas import tpu as pltpu


# ----------------------------- complex helpers ------------------------------

def _cmul(ar, ai, br, bi):
    # (ar + i*ai) * (br + i*bi)
    return ar * br - ai * bi, ar * bi + ai * br


def _ctanh(ar, ai):
    # tanh(a + i*b) = sinh(2a)/(cosh(2a)+cos(2b)) + i*sin(2b)/(cosh(2a)+cos(2b)).
    # With t = tanh(a): sinh(2a) = 2t/(1-t^2), cosh(2a) = (1+t^2)/(1-t^2), so
    #   re = 2t / D,  im = sin(2b)*(1-t^2) / D,  D = (1+t^2) + cos(2b)*(1-t^2).
    # 4 EUP ops (tanh, cos, sin, approx recip) and no exp() overflow.
    t = jnp.tanh(ar)
    t2 = t * t
    one_m = 1.0 - t2
    one_p = 1.0 + t2
    c2b = jnp.cos(2.0 * ai)
    s2b = jnp.sin(2.0 * ai)
    inv = pl.reciprocal(one_p + c2b * one_m, approx=True)
    return (2.0 * t) * inv, (s2b * one_m) * inv


def _normalize(xr, xi):
    # tanh(|z|) * z/|z|   (z == 0 -> 0, matching tanh(0)*(cos(atan2(0,0)) + i*sin)).
    # One rsqrt + one tanh; no sqrt and no divides.
    r2 = xr * xr + xi * xi
    inv_rho = lax.rsqrt(jnp.where(r2 > 0.0, r2, 1.0))
    rho = r2 * inv_rho                 # == sqrt(r2); == 0 when r2 == 0
    s = jnp.tanh(rho) * inv_rho        # == tanh(rho)/rho; == 0 when r2 == 0
    return s * xr, s * xi


# --------------------------------- kernel -----------------------------------

def optaeg_kernel(p_ref, x_ref, o_ref):
    # p_ref (SMEM, 12 f32): vx_r, vx_i, vy_r, vy_i, wx_r, wx_i, wy_r, wy_i,
    #                       af_r, af_i, mf_r, mf_i
    # x_ref / o_ref (VMEM): (2, TR, TC) f32 — [0] = real plane, [1] = imag plane.
    vx_r, vx_i = p_ref[0], p_ref[1]
    vy_r, vy_i = p_ref[2], p_ref[3]
    wx_r, wx_i = p_ref[4], p_ref[5]
    wy_r, wy_i = p_ref[6], p_ref[7]
    af_r, af_i = p_ref[8], p_ref[9]
    mf_r, mf_i = p_ref[10], p_ref[11]

    xr = x_ref[0]
    xi = x_ref[1]

    # data = normalize(data)
    dr, di = _normalize(xr, xi)

    # v = data * (1 + vy) + vx ; w = data * (1 + wy) + wx   (scalars broadcast)
    vr, vi = _cmul(dr, di, 1.0 + vy_r, vy_i)
    vr, vi = vr + vx_r, vi + vx_i
    wr, wi = _cmul(dr, di, 1.0 + wy_r, wy_i)
    wr, wi = wr + wx_r, wi + wx_i

    # dx = afactor * sum(v * tanh(w), dim=-1)   (size-1 axis -> just the product)
    twr, twi = _ctanh(wr, wi)
    sr, si = _cmul(vr, vi, twr, twi)
    dxr, dxi = _cmul(af_r, af_i, sr, si)

    # dy = mfactor * tanh(data)
    tdr, tdi = _ctanh(dr, di)
    dyr, dyi = _cmul(mf_r, mf_i, tdr, tdi)

    # data = data * (1 + dy) + dx ; data = normalize(data)
    o1r, o1i = _cmul(dr, di, 1.0 + dyr, dyi)
    outr, outi = _normalize(o1r + dxr, o1i + dxi)
    o_ref[0] = outr
    o_ref[1] = outi


# ------------------------------- entry points --------------------------------

def optaeg_v3_packed(planes, params, *, row_tile=None):
    """Run the kernel on an already laid-out slab.

    planes: float32 (2, R, C), plane 0 = real / plane 1 = imag, with C % 128 == 0
    and R a multiple of `row_tile` (itself a multiple of 8).  This is the layout a
    surrounding model should keep its activations in — it avoids the complex64
    split / recombine HBM passes done by `optaeg_v3` below.
    """
    _, rows, cols = planes.shape
    if row_tile is None:
        row_tile = 256
        while row_tile > 8 and (rows % row_tile != 0 or row_tile > rows):
            row_tile //= 2
    assert cols % 128 == 0 and row_tile % 8 == 0 and rows % row_tile == 0, (
        "planes must be (2, R, C) with C % 128 == 0 and R a multiple of an 8-aligned row tile")

    grid = (rows // row_tile,)
    return pl.pallas_call(
        optaeg_kernel,
        out_shape=jax.ShapeDtypeStruct(planes.shape, jnp.float32),
        grid_spec=pltpu.PrefetchScalarGridSpec(
            num_scalar_prefetch=0,
            grid=grid,
            in_specs=[
                pl.BlockSpec(memory_space=pltpu.MemorySpace.SMEM),       # 12 params
                pl.BlockSpec((2, row_tile, cols), lambda i: (0, i, 0)),  # packed planes
            ],
            out_specs=pl.BlockSpec((2, row_tile, cols), lambda i: (0, i, 0)),
        ),
        compiler_params=pltpu.CompilerParams(
            dimension_semantics=("parallel",),
        ),
    )(params, planes)


def _plan_layout(total):
    """View `total` elements as a (rows, cols) slab: cols a multiple of 128 (up to
    1024), rows padded to a multiple of the row tile (multiple of 8, up to 256).
    Max tile = 256 x 1024 f32 = 1 MiB per plane."""
    cols = 1024
    while cols > 128 and total < 8 * cols:
        cols //= 2
    rows = pl.cdiv(total, cols)
    row_tile = 256
    while row_tile > 8 and row_tile > rows:
        row_tile //= 2
    rows = pl.cdiv(rows, row_tile) * row_tile
    return rows, cols, row_tile


def optaeg_v3_planes(xr, xi, params):
    """xr, xi: real / imag planes of any (identical) shape. Returns (out_r, out_i)
    float32 planes of the same shape."""
    shape = xr.shape
    total = xr.size
    rows, cols, row_tile = _plan_layout(total)
    padded = rows * cols

    flat = jnp.stack([xr.reshape(-1), xi.reshape(-1)]).astype(jnp.float32)
    if padded != total:
        flat = jnp.pad(flat, ((0, 0), (0, padded - total)))
    planes = flat.reshape(2, rows, cols)

    out = optaeg_v3_packed(planes, jnp.asarray(params, jnp.float32), row_tile=row_tile)
    out = out.reshape(2, padded)[:, :total]
    return out[0].reshape(shape), out[1].reshape(shape)


def optaeg_v3(x, params):
    """complex64 interface matching the PyTorch module's forward(). params: f32[12]."""
    # TODO(synk): for end-to-end performance keep activations as the packed f32
    # (2, R, C) slab (optaeg_v3_packed) across layers; the real/imag split and
    # recombine below are extra HBM passes that only exist to honour the complex64
    # interface of the original module.
    out_r, out_i = optaeg_v3_planes(jnp.real(x), jnp.imag(x), params)
    return (out_r + 1j * out_i).astype(jnp.complex64)


# ------------------------------- reference -----------------------------------

def optaeg_v3_reference(x, params):
    """Pure-JAX reference mirroring the PyTorch module exactly."""
    vx = params[0] + 1j * params[1]
    vy = params[2] + 1j * params[3]
    wx = params[4] + 1j * params[5]
    wy = params[6] + 1j * params[7]
    af = params[8] + 1j * params[9]
    mf = params[10] + 1j * params[11]

    def normalize(z):
        rho = jnp.abs(z)
        theta = jnp.arctan2(jnp.imag(z), jnp.real(z))
        return jnp.tanh(rho) * (jnp.cos(theta) + 1j * jnp.sin(theta))

    shape = x.shape
    b = shape[0]
    d = x.reshape(b, -1)
    d = normalize(d)
    v = d * (1 + vy) + vx
    w = d * (1 + wy) + wx
    dx = af * (v * jnp.tanh(w))     # sum over size-1 axis == identity
    dy = mf * jnp.tanh(d)
    d = d * (1 + dy) + dx
    d = normalize(d)
    return d.reshape(shape)


if __name__ == "__main__":
    key = jax.random.PRNGKey(0)
    kpr, kxr, kxi = jax.random.split(key, 3)

    # th.rand(..., dtype=complex64)/100 draws real & imag parts uniform in [0,1)/100.
    params = jax.random.uniform(kpr, (12,), dtype=jnp.float32) / 100.0

    # complex64 input, NCHW-flavored shape (B, C, H, W) = (2, 4, 16, 16)
    xr = jax.random.normal(kxr, (2, 4, 16, 16), dtype=jnp.float32)
    xi = jax.random.normal(kxi, (2, 4, 16, 16), dtype=jnp.float32)
    x = (xr + 1j * xi).astype(jnp.complex64)

    out = jax.block_until_ready(jax.jit(optaeg_v3)(x, params))
    ref = jax.block_until_ready(optaeg_v3_reference(x, params))

    assert out.shape == x.shape and out.dtype == jnp.complex64
    assert jnp.allclose(out, ref, atol=1e-5, rtol=1e-4), "mismatch vs reference"
    print("KERNEL_OK")
</pallas_src>

<mosaic_0001>
module attributes {stable_mosaic.version = 11 : i64} {
  func.func @optaeg_kernel(%arg0: i32, %arg1: memref<12xf32, #tpu.memory_space<smem>>, %arg2: memref<2x8x256xf32, #tpu.memory_space<vmem>>, %arg3: memref<2x8x256xf32, #tpu.memory_space<vmem>>) attributes {dimension_semantics = [#tpu.dimension_semantics<parallel>], iteration_bounds = array<i64: 1>, scalar_prefetch = 0 : i64, scratch_operands = 0 : i64, tpu.core_type = #tpu.core_type<tc>, window_params = [{transform_indices = @transform_0, window_bounds = array<i64: 12>}, {transform_indices = @transform_1, window_bounds = array<i64: 2, 8, 256>}, {transform_indices = @transform_2, window_bounds = array<i64: 2, 8, 256>}]} {
    %c0 = arith.constant 0 : index
    %0 = memref.load %arg1[%c0] : memref<12xf32, #tpu.memory_space<smem>>
    %c1 = arith.constant 1 : index
    %1 = memref.load %arg1[%c1] : memref<12xf32, #tpu.memory_space<smem>>
    %c2 = arith.constant 2 : index
    %2 = memref.load %arg1[%c2] : memref<12xf32, #tpu.memory_space<smem>>
    %c3 = arith.constant 3 : index
    %3 = memref.load %arg1[%c3] : memref<12xf32, #tpu.memory_space<smem>>
    %c4 = arith.constant 4 : index
    %4 = memref.load %arg1[%c4] : memref<12xf32, #tpu.memory_space<smem>>
    %c5 = arith.constant 5 : index
    %5 = memref.load %arg1[%c5] : memref<12xf32, #tpu.memory_space<smem>>
    %c6 = arith.constant 6 : index
    %6 = memref.load %arg1[%c6] : memref<12xf32, #tpu.memory_space<smem>>
    %c7 = arith.constant 7 : index
    %7 = memref.load %arg1[%c7] : memref<12xf32, #tpu.memory_space<smem>>
    %c8 = arith.constant 8 : index
    %8 = memref.load %arg1[%c8] : memref<12xf32, #tpu.memory_space<smem>>
    %c9 = arith.constant 9 : index
    %9 = memref.load %arg1[%c9] : memref<12xf32, #tpu.memory_space<smem>>
    %c10 = arith.constant 10 : index
    %10 = memref.load %arg1[%c10] : memref<12xf32, #tpu.memory_space<smem>>
    %c11 = arith.constant 11 : index
    %11 = memref.load %arg1[%c11] : memref<12xf32, #tpu.memory_space<smem>>
    %c0_0 = arith.constant 0 : index
    %c0_1 = arith.constant 0 : index
    %c0_2 = arith.constant 0 : index
    %12 = vector.load %arg2[%c0_0, %c0_1, %c0_2] : memref<2x8x256xf32, #tpu.memory_space<vmem>>, vector<1x8x256xf32>
    %13 = vector.shape_cast %12 : vector<1x8x256xf32> to vector<8x256xf32>
    %c1_3 = arith.constant 1 : index
    %c0_4 = arith.constant 0 : index
    %c0_5 = arith.constant 0 : index
    %14 = vector.load %arg2[%c1_3, %c0_4, %c0_5] : memref<2x8x256xf32, #tpu.memory_space<vmem>>, vector<1x8x256xf32>
    %15 = vector.shape_cast %14 : vector<1x8x256xf32> to vector<8x256xf32>
    %16 = arith.mulf %13, %13 : vector<8x256xf32>
    %17 = arith.mulf %15, %15 : vector<8x256xf32>
    %18 = arith.addf %16, %17 : vector<8x256xf32>
    %cst = arith.constant 0.000000e+00 : f32
    %19 = vector.broadcast %cst : f32 to vector<8x256xf32>
    %20 = arith.cmpf ogt, %18, %19 : vector<8x256xf32>
    %cst_6 = arith.constant 1.000000e+00 : f32
    %21 = vector.broadcast %cst_6 : f32 to vector<8x256xf32>
    %22 = arith.select %20, %18, %21 : vector<8x256xi1>, vector<8x256xf32>
    %23 = math.rsqrt %22 : vector<8x256xf32>
    %24 = arith.mulf %18, %23 : vector<8x256xf32>
    %25 = math.tanh %24 : vector<8x256xf32>
    %26 = arith.mulf %25, %23 : vector<8x256xf32>
    %27 = arith.mulf %26, %13 : vector<8x256xf32>
    %28 = arith.mulf %26, %15 : vector<8x256xf32>
    %cst_7 = arith.constant 1.000000e+00 : f32
    %29 = arith.addf %cst_7, %2 : f32
    %30 = vector.broadcast %29 : f32 to vector<8x256xf32>
    %31 = arith.mulf %27, %30 : vector<8x256xf32>
    %32 = vector.broadcast %3 : f32 to vector<8x256xf32>
    %33 = arith.mulf %28, %32 : vector<8x256xf32>
    %34 = arith.subf %31, %33 : vector<8x256xf32>
    %35 = vector.broadcast %3 : f32 to vector<8x256xf32>
    %36 = arith.mulf %27, %35 : vector<8x256xf32>
    %37 = vector.broadcast %29 : f32 to vector<8x256xf32>
    %38 = arith.mulf %28, %37 : vector<8x256xf32>
    %39 = arith.addf %36, %38 : vector<8x256xf32>
    %40 = vector.broadcast %0 : f32 to vector<8x256xf32>
    %41 = arith.addf %34, %40 : vector<8x256xf32>
    %42 = vector.broadcast %1 : f32 to vector<8x256xf32>
    %43 = arith.addf %39, %42 : vector<8x256xf32>
    %cst_8 = arith.constant 1.000000e+00 : f32
    %44 = arith.addf %cst_8, %6 : f32
    %45 = vector.broadcast %44 : f32 to vector<8x256xf32>
    %46 = arith.mulf %27, %45 : vector<8x256xf32>
    %47 = vector.broadcast %7 : f32 to vector<8x256xf32>
    %48 = arith.mulf %28, %47 : vector<8x256xf32>
    %49 = arith.subf %46, %48 : vector<8x256xf32>
    %50 = vector.broadcast %7 : f32 to vector<8x256xf32>
    %51 = arith.mulf %27, %50 : vector<8x256xf32>
    %52 = vector.broadcast %44 : f32 to vector<8x256xf32>
    %53 = arith.mulf %28, %52 : vector<8x256xf32>
    %54 = arith.addf %51, %53 : vector<8x256xf32>
    %55 = vector.broadcast %4 : f32 to vector<8x256xf32>
    %56 = arith.addf %49, %55 : vector<8x256xf32>
    %57 = vector.broadcast %5 : f32 to vector<8x256xf32>
    %58 = arith.addf %54, %57 : vector<8x256xf32>
    %59 = math.tanh %56 : vector<8x256xf32>
    %60 = arith.mulf %59, %59 : vector<8x256xf32>
    %cst_9 = arith.constant 1.000000e+00 : f32
    %61 = vector.broadcast %cst_9 : f32 to vector<8x256xf32>
    %62 = arith.subf %61, %60 : vector<8x256xf32>
    %cst_10 = arith.constant 1.000000e+00 : f32
    %63 = vector.broadcast %cst_10 : f32 to vector<8x256xf32>
    %64 = arith.addf %63, %60 : vector<8x256xf32>
    %cst_11 = arith.constant 2.000000e+00 : f32
    %65 = vector.broadcast %cst_11 : f32 to vector<8x256xf32>
    %66 = arith.mulf %65, %58 : vector<8x256xf32>
    %67 = math.cos %66 : vector<8x256xf32>
    %cst_12 = arith.constant 2.000000e+00 : f32
    %68 = vector.broadcast %cst_12 : f32 to vector<8x256xf32>
    %69 = arith.mulf %68, %58 : vector<8x256xf32>
    %70 = math.sin %69 : vector<8x256xf32>
    %71 = arith.mulf %67, %62 : vector<8x256xf32>
    %72 = arith.addf %64, %71 : vector<8x256xf32>
    %73 = tpu.reciprocal %72 {approx = true} : vector<8x256xf32> -> vector<8x256xf32>
    %cst_13 = arith.constant 2.000000e+00 : f32
    %74 = vector.broadcast %cst_13 : f32 to vector<8x256xf32>
    %75 = arith.mulf %74, %59 : vector<8x256xf32>
    %76 = arith.mulf %75, %73 : vector<8x256xf32>
    %77 = arith.mulf %70, %62 : vector<8x256xf32>
    %78 = arith.mulf %77, %73 : vector<8x256xf32>
    %79 = arith.mulf %41, %76 : vector<8x256xf32>
    %80 = arith.mulf %43, %78 : vector<8x256xf32>
    %81 = arith.subf %79, %80 : vector<8x256xf32>
    %82 = arith.mulf %41, %78 : vector<8x256xf32>
    %83 = arith.mulf %43, %76 : vector<8x256xf32>
    %84 = arith.addf %82, %83 : vector<8x256xf32>
    %85 = vector.broadcast %8 : f32 to vector<8x256xf32>
    %86 = arith.mulf %85, %81 : vector<8x256xf32>
    %87 = vector.broadcast %9 : f32 to vector<8x256xf32>
    %88 = arith.mulf %87, %84 : vector<8x256xf32>
    %89 = arith.subf %86, %88 : vector<8x256xf32>
    %90 = vector.broadcast %8 : f32 to vector<8x256xf32>
    %91 = arith.mulf %90, %84 : vector<8x256xf32>
    %92 = vector.broadcast %9 : f32 to vector<8x256xf32>
    %93 = arith.mulf %92, %81 : vector<8x256xf32>
    %94 = arith.addf %91, %93 : vector<8x256xf32>
    %95 = math.tanh %27 : vector<8x256xf32>
    %96 = arith.mulf %95, %95 : vector<8x256xf32>
    %cst_14 = arith.constant 1.000000e+00 : f32
    %97 = vector.broadcast %cst_14 : f32 to vector<8x256xf32>
    %98 = arith.subf %97, %96 : vector<8x256xf32>
    %cst_15 = arith.constant 1.000000e+00 : f32
    %99 = vector.broadcast %cst_15 : f32 to vector<8x256xf32>
    %100 = arith.addf %99, %96 : vector<8x256xf32>
    %cst_16 = arith.constant 2.000000e+00 : f32
    %101 = vector.broadcast %cst_16 : f32 to vector<8x256xf32>
    %102 = arith.mulf %101, %28 : vector<8x256xf32>
    %103 = math.cos %102 : vector<8x256xf32>
    %cst_17 = arith.constant 2.000000e+00 : f32
    %104 = vector.broadcast %cst_17 : f32 to vector<8x256xf32>
    %105 = arith.mulf %104, %28 : vector<8x256xf32>
    %106 = math.sin %105 : vector<8x256xf32>
    %107 = arith.mulf %103, %98 : vector<8x256xf32>
    %108 = arith.addf %100, %107 : vector<8x256xf32>
    %109 = tpu.reciprocal %108 {approx = true} : vector<8x256xf32> -> vector<8x256xf32>
    %cst_18 = arith.constant 2.000000e+00 : f32
    %110 = vector.broadcast %cst_18 : f32 to vector<8x256xf32>
    %111 = arith.mulf %110, %95 : vector<8x256xf32>
    %112 = arith.mulf %111, %109 : vector<8x256xf32>
    %113 = arith.mulf %106, %98 : vector<8x256xf32>
    %114 = arith.mulf %113, %109 : vector<8x256xf32>
    %115 = vector.broadcast %10 : f32 to vector<8x256xf32>
    %116 = arith.mulf %115, %112 : vector<8x256xf32>
    %117 = vector.broadcast %11 : f32 to vector<8x256xf32>
    %118 = arith.mulf %117, %114 : vector<8x256xf32>
    %119 = arith.subf %116, %118 : vector<8x256xf32>
    %120 = vector.broadcast %10 : f32 to vector<8x256xf32>
    %121 = arith.mulf %120, %114 : vector<8x256xf32>
    %122 = vector.broadcast %11 : f32 to vector<8x256xf32>
    %123 = arith.mulf %122, %112 : vector<8x256xf32>
    %124 = arith.addf %121, %123 : vector<8x256xf32>
    %cst_19 = arith.constant 1.000000e+00 : f32
    %125 = vector.broadcast %cst_19 : f32 to vector<8x256xf32>
    %126 = arith.addf %125, %119 : vector<8x256xf32>
    %127 = arith.mulf %27, %126 : vector<8x256xf32>
    %128 = arith.mulf %28, %124 : vector<8x256xf32>
    %129 = arith.subf %127, %128 : vector<8x256xf32>
    %130 = arith.mulf %27, %124 : vector<8x256xf32>
    %131 = arith.mulf %28, %126 : vector<8x256xf32>
    %132 = arith.addf %130, %131 : vector<8x256xf32>
    %133 = arith.addf %129, %89 : vector<8x256xf32>
    %134 = arith.addf %132, %94 : vector<8x256xf32>
    %135 = arith.mulf %133, %133 : vector<8x256xf32>
    %136 = arith.mulf %134, %134 : vector<8x256xf32>
    %137 = arith.addf %135, %136 : vector<8x256xf32>
    %cst_20 = arith.constant 0.000000e+00 : f32
    %138 = vector.broadcast %cst_20 : f32 to vector<8x256xf32>
    %139 = arith.cmpf ogt, %137, %138 : vector<8x256xf32>
    %cst_21 = arith.constant 1.000000e+00 : f32
    %140 = vector.broadcast %cst_21 : f32 to vector<8x256xf32>
    %141 = arith.select %139, %137, %140 : vector<8x256xi1>, vector<8x256xf32>
    %142 = math.rsqrt %141 : vector<8x256xf32>
    %143 = arith.mulf %137, %142 : vector<8x256xf32>
    %144 = math.tanh %143 : vector<8x256xf32>
    %145 = arith.mulf %144, %142 : vector<8x256xf32>
    %146 = arith.mulf %145, %133 : vector<8x256xf32>
    %147 = arith.mulf %145, %134 : vector<8x256xf32>
    %c0_22 = arith.constant 0 : index
    %c0_23 = arith.constant 0 : index
    %c0_24 = arith.constant 0 : index
    %148 = vector.load %arg3[%c0_22, %c0_23, %c0_24] : memref<2x8x256xf32, #tpu.memory_space<vmem>>, vector<1x8x256xf32>
    %149 = vector.shape_cast %148 : vector<1x8x256xf32> to vector<8x256xf32>
    %150 = vector.shape_cast %146 : vector<8x256xf32> to vector<1x8x256xf32>
    tpu.vector_store %arg3[%c0_22, %c0_23, %c0_24], %150 {strides = array<i32>} : memref<2x8x256xf32, #tpu.memory_space<vmem>>, vector<1x8x256xf32>,
    %c1_25 = arith.constant 1 : index
    %c0_26 = arith.constant 0 : index
    %c0_27 = arith.constant 0 : index
    %151 = vector.load %arg3[%c1_25, %c0_26, %c0_27] : memref<2x8x256xf32, #tpu.memory_space<vmem>>, vector<1x8x256xf32>
    %152 = vector.shape_cast %151 : vector<1x8x256xf32> to vector<8x256xf32>
    %153 = vector.shape_cast %147 : vector<8x256xf32> to vector<1x8x256xf32>
    tpu.vector_store %arg3[%c1_25, %c0_26, %c0_27], %153 {strides = array<i32>} : memref<2x8x256xf32, #tpu.memory_space<vmem>>, vector<1x8x256xf32>,
    return
  }
  func.func @transform_0(%arg0: i32) -> i32 {
    %c0_i32 = arith.constant 0 : i32
    %c0_i32_0 = arith.constant 0 : i32
    return %c0_i32 : i32
  }
  func.func @transform_1(%arg0: i32) -> (i32, i32, i32) {
    %c0_i32 = arith.constant 0 : i32
    %c0_i32_0 = arith.constant 0 : i32
    %c0_i32_1 = arith.constant 0 : i32
    return %c0_i32, %arg0, %c0_i32_0 : i32, i32, i32
  }
  func.func @transform_2(%arg0: i32) -> (i32, i32, i32) {
    %c0_i32 = arith.constant 0 : i32
    %c0_i32_0 = arith.constant 0 : i32
    %c0_i32_1 = arith.constant 0 : i32
    return %c0_i32, %arg0, %c0_i32_0 : i32, i32, i32
  }
}

</mosaic_0001>

<llo_original>
// kernel: custom-call.1
$region0: #{custom-call.1}
  %s0 = inlined_call_operand.hbm [shape: c64[2,4,16,16], index: 0, kind: input, shape index: {}]
  %s1 = inlined_call_operand.vmem [shape: f32[2,4,16,16], index: 1, kind: output, shape index: {}]
  %s2 = scalar_lea.hbm %s0, 128
  $region1: #{custom-call.1} parent=0
    #allocation0 [shape = 's32[1]{0}', space=sflag, size = 0x4, scoped, tag = 'scoped memory for custom-call.1']
    %3 = vsyncpa [#allocation0], 0
    %s5 = sshll.u32 %s2, 4
    %s6 = int_to_ptr.hbm [resolvable:$true] %s5
    %s7 = sshll.u32 %s1, 4
    %s8 = int_to_ptr.vmem [resolvable:$true] %s7
    %10 = dma.hbm_to_vmem [thread:$0]  %s6, 2048, %s8, [#allocation0]
    %12 = dma.done [#allocation0], 2048
    %13 = vsyncpa [#allocation0], 1

// kernel: custom-call
$region0: #{custom-call}
  %s0 = inlined_call_operand.hbm [shape: c64[2,4,16,16], index: 0, kind: input, shape index: {}]
  %s1 = inlined_call_operand.vmem [shape: f32[2,4,16,16], index: 1, kind: output, shape index: {}]
  $region1: #{custom-call} parent=0
    #allocation0 [shape = 's32[1]{0}', space=sflag, size = 0x4, scoped, tag = 'scoped memory for custom-call']
    %2 = vsyncpa [#allocation0], 0
    %s4 = sshll.u32 %s0, 4
    %s5 = int_to_ptr.hbm [resolvable:$true] %s4
    %s6 = sshll.u32 %s1, 4
    %s7 = int_to_ptr.vmem [resolvable:$true] %s6
    %9 = dma.hbm_to_vmem [thread:$0]  %s5, 2048, %s7, [#allocation0]
    %11 = dma.done [#allocation0], 2048
    %12 = vsyncpa [#allocation0], 1

// kernel: squeeze.3
$region0: #{squeeze.3}
  %s0 = inlined_call_operand.vmem [shape: f32[2048], index: 0, kind: input, shape index: {}]
  %s1 = inlined_call_operand.vmem [shape: f32[2,4,16,16], index: 1, kind: output, shape index: {}]
  %v2 = vld [vmem:[%s0] sm:$0xff]
  %vm3 = vcmask 130048
  %4 = vst.msk [vmem:[%s1] ss:$8 sm:$0xf] %vm3, %v2
  %5 = vst.msk [vmem:[%s1] ss:$8 sm:$0xf0] %vm3, %v2
  %s6 = scalar_lea.vmem %s0, 8
  %v7 = vld [vmem:[%s6] sm:$0xff]
  %vm8 = vcmask 130048
  %s9 = scalar_lea.vmem %s1, 64
  %10 = vst.msk [vmem:[%s9] ss:$8 sm:$0xf] %vm8, %v7
  %s11 = scalar_lea.vmem %s1, 64
  %12 = vst.msk [vmem:[%s11] ss:$8 sm:$0xf0] %vm8, %v7
  %v13 = vld [vmem:[%s0] sm:$0xff]
  %14 = vrot.lane.b32.xlu0 %v13, 112
  %v15 = vpop.permute.xlu0 %14
  %vm16 = vcmask 130048
  %s17 = scalar_lea.vmem %s1, 1
  %18 = vst.msk [vmem:[%s17] ss:$8 sm:$0xf] %vm16, %v15
  %s19 = scalar_lea.vmem %s1, 1
  %20 = vst.msk [vmem:[%s19] ss:$8 sm:$0xf0] %vm16, %v15
  %s21 = scalar_lea.vmem %s0, 8
  %v22 = vld [vmem:[%s21] sm:$0xff]
  %23 = vrot.lane.b32.xlu0 %v22, 112
  %v24 = vpop.permute.xlu0 %23
  %vm25 = vcmask 130048
  %s26 = scalar_lea.vmem %s1, 65
  %27 = vst.msk [vmem:[%s26] ss:$8 sm:$0xf] %vm25, %v24
  %s28 = scalar_lea.vmem %s1, 65
  %29 = vst.msk [vmem:[%s28] ss:$8 sm:$0xf0] %vm25, %v24
  %v30 = vld [vmem:[%s0] sm:$0xff]
  %31 = vrot.lane.b32.xlu0 %v30, 96
  %v32 = vpop.permute.xlu0 %31
  %vm33 = vcmask 130048
  %s34 = scalar_lea.vmem %s1, 2
  %35 = vst.msk [vmem:[%s34] ss:$8 sm:$0xf] %vm33, %v32
  %s36 = scalar_lea.vmem %s1, 2
  %37 = vst.msk [vmem:[%s36] ss:$8 sm:$0xf0] %vm33, %v32
  %s38 = scalar_lea.vmem %s0, 8
  %v39 = vld [vmem:[%s38] sm:$0xff]
  %40 = vrot.lane.b32.xlu0 %v39, 96
  %v41 = vpop.permute.xlu0 %40
  %vm42 = vcmask 130048
  %s43 = scalar_lea.vmem %s1, 66
  %44 = vst.msk [vmem:[%s43] ss:$8 sm:$0xf] %vm42, %v41
  %s45 = scalar_lea.vmem %s1, 66
  %46 = vst.msk [vmem:[%s45] ss:$8 sm:$0xf0] %vm42, %v41
  %v47 = vld [vmem:[%s0] sm:$0xff]
  %48 = vrot.lane.b32.xlu0 %v47, 80
  %v49 = vpop.permute.xlu0 %48
  %vm50 = vcmask 130048
  %s51 = scalar_lea.vmem %s1, 3
  %52 = vst.msk [vmem:[%s51] ss:$8 sm:$0xf] %vm50, %v49
  %s53 = scalar_lea.vmem %s1, 3
  %54 = vst.msk [vmem:[%s53] ss:$8 sm:$0xf0] %vm50, %v49
  %s55 = scalar_lea.vmem %s0, 8
  %v56 = vld [vmem:[%s55] sm:$0xff]
  %57 = vrot.lane.b32.xlu0 %v56, 80
  %v58 = vpop.permute.xlu0 %57
  %vm59 = vcmask 130048
  %s60 = scalar_lea.vmem %s1, 67
  %61 = vst.msk [vmem:[%s60] ss:$8 sm:$0xf] %vm59, %v58
  %s62 = scalar_lea.vmem %s1, 67
  %63 = vst.msk [vmem:[%s62] ss:$8 sm:$0xf0] %vm59, %v58
  %v64 = vld [vmem:[%s0] sm:$0xff]
  %65 = vrot.lane.b32.xlu0 %v64, 64
  %v66 = vpop.permute.xlu0 %65
  %vm67 = vcmask 130048
  %s68 = scalar_lea.vmem %s1, 4
  %69 = vst.msk [vmem:[%s68] ss:$8 sm:$0xf] %vm67, %v66
  %s70 = scalar_lea.vmem %s1, 4
  %71 = vst.msk [vmem:[%s70] ss:$8 sm:$0xf0] %vm67, %v66
  %s72 = scalar_lea.vmem %s0, 8
  %v73 = vld [vmem:[%s72] sm:$0xff]
  %74 = vrot.lane.b32.xlu0 %v73, 64
  %v75 = vpop.permute.xlu0 %74
  %vm76 = vcmask 130048
  %s77 = scalar_lea.vmem %s1, 68
  %78 = vst.msk [vmem:[%s77] ss:$8 sm:$0xf] %vm76, %v75
  %s79 = scalar_lea.vmem %s1, 68
  %80 = vst.msk [vmem:[%s79] ss:$8 sm:$0xf0] %vm76, %v75
  %v81 = vld [vmem:[%s0] sm:$0xff]
  %82 = vrot.lane.b32.xlu0 %v81, 48
  %v83 = vpop.permute.xlu0 %82
  %vm84 = vcmask 130048
  %s85 = scalar_lea.vmem %s1, 5
  %86 = vst.msk [vmem:[%s85] ss:$8 sm:$0xf] %vm84, %v83
  %s87 = scalar_lea.vmem %s1, 5
  %88 = vst.msk [vmem:[%s87] ss:$8 sm:$0xf0] %vm84, %v83
  %s89 = scalar_lea.vmem %s0, 8
  %v90 = vld [vmem:[%s89] sm:$0xff]
  %91 = vrot.lane.b32.xlu0 %v90, 48
  %v92 = vpop.permute.xlu0 %91
  %vm93 = vcmask 130048
  %s94 = scalar_lea.vmem %s1, 69
  %95 = vst.msk [vmem:[%s94] ss:$8 sm:$0xf] %vm93, %v92
  %s96 = scalar_lea.vmem %s1, 69
  %97 = vst.msk [vmem:[%s96] ss:$8 sm:$0xf0] %vm93, %v92
  %v98 = vld [vmem:[%s0] sm:$0xff]
  %99 = vrot.lane.b32.xlu0 %v98, 32
  %v100 = vpop.permute.xlu0 %99
  %vm101 = vcmask 130048
  %s102 = scalar_lea.vmem %s1, 6
  %103 = vst.msk [vmem:[%s102] ss:$8 sm:$0xf] %vm101, %v100
  %s104 = scalar_lea.vmem %s1, 6
  %105 = vst.msk [vmem:[%s104] ss:$8 sm:$0xf0] %vm101, %v100
  %s106 = scalar_lea.vmem %s0, 8
  %v107 = vld [vmem:[%s106] sm:$0xff]
  %108 = vrot.lane.b32.xlu0 %v107, 32
  %v109 = vpop.permute.xlu0 %108
  %vm110 = vcmask 130048
  %s111 = scalar_lea.vmem %s1, 70
  %112 = vst.msk [vmem:[%s111] ss:$8 sm:$0xf] %vm110, %v109
  %s113 = scalar_lea.vmem %s1, 70
  %114 = vst.msk [vmem:[%s113] ss:$8 sm:$0xf0] %vm110, %v109
  %v115 = vld [vmem:[%s0] sm:$0xff]
  %116 = vrot.lane.b32.xlu0 %v115, 16
  %v117 = vpop.permute.xlu0 %116
  %vm118 = vcmask 130048
  %s119 = scalar_lea.vmem %s1, 7
  %120 = vst.msk [vmem:[%s119] ss:$8 sm:$0xf] %vm118, %v117
  %s121 = scalar_lea.vmem %s1, 7
  %122 = vst.msk [vmem:[%s121] ss:$8 sm:$0xf0] %vm118, %v117
  %s123 = scalar_lea.vmem %s0, 8
  %v124 = vld [vmem:[%s123] sm:$0xff]
  %125 = vrot.lane.b32.xlu0 %v124, 16
  %v126 = vpop.permute.xlu0 %125
  %vm127 = vcmask 130048
  %s128 = scalar_lea.vmem %s1, 71
  %129 = vst.msk [vmem:[%s128] ss:$8 sm:$0xf] %vm127, %v126
  %s130 = scalar_lea.vmem %s1, 71
  %131 = vst.msk [vmem:[%s130] ss:$8 sm:$0xf0] %vm127, %v126

// kernel: squeeze.2
$region0: #{squeeze.2}
  %s0 = inlined_call_operand.vmem [shape: f32[1,8,256], index: 0, kind: input, shape index: {}]
  %s1 = inlined_call_operand.vmem [shape: f32[2,4,16,16], index: 1, kind: output, shape index: {}]
  %v2 = vld [vmem:[%s0] sm:$0xff]
  %vm3 = vcmask 130048
  %4 = vst.msk [vmem:[%s1] ss:$16 sm:$0x3] %vm3, %v2
  %5 = vst.msk [vmem:[%s1] ss:$16 sm:$0xc] %vm3, %v2
  %6 = vst.msk [vmem:[%s1] ss:$16 sm:$0x30] %vm3, %v2
  %7 = vst.msk [vmem:[%s1] ss:$16 sm:$0xc0] %vm3, %v2
  %s8 = scalar_lea.vmem %s0, 8
  %v9 = vld [vmem:[%s8] sm:$0xff]
  %vm10 = vcmask 130048
  %s11 = scalar_lea.vmem %s1, 8
  %12 = vst.msk [vmem:[%s11] ss:$16 sm:$0x3] %vm10, %v9
  %s13 = scalar_lea.vmem %s1, 8
  %14 = vst.msk [vmem:[%s13] ss:$16 sm:$0xc] %vm10, %v9
  %s15 = scalar_lea.vmem %s1, 8
  %16 = vst.msk [vmem:[%s15] ss:$16 sm:$0x30] %vm10, %v9
  %s17 = scalar_lea.vmem %s1, 8
  %18 = vst.msk [vmem:[%s17] ss:$16 sm:$0xc0] %vm10, %v9
  %v19 = vld.sshfl [vmem:[%s0] sm:$0xff pattern:$0xb3a29180]
  %20 = vrot.lane.b32.xlu0 %v19, 112
  %v21 = vpop.permute.xlu0 %20
  %vm22 = vcmask 130048
  %s23 = scalar_lea.vmem %s1, 1
  %24 = vst.msk [vmem:[%s23] ss:$8 sm:$0xf] %vm22, %v21
  %s25 = scalar_lea.vmem %s1, 1
  %26 = vst.msk [vmem:[%s25] ss:$8 sm:$0xf0] %vm22, %v21
  %s27 = scalar_lea.vmem %s0, 4
  %v28 = vld.sshfl [vmem:[%s27] sm:$0xff pattern:$0xb3a29180]
  %29 = vrot.lane.b32.xlu0 %v28, 112
  %v30 = vpop.permute.xlu0 %29
  %vm31 = vcmask 130048
  %s32 = scalar_lea.vmem %s1, 65
  %33 = vst.msk [vmem:[%s32] ss:$8 sm:$0xf] %vm31, %v30
  %s34 = scalar_lea.vmem %s1, 65
  %35 = vst.msk [vmem:[%s34] ss:$8 sm:$0xf0] %vm31, %v30
  %v36 = vld.sshfl [vmem:[%s0] sm:$0xff pattern:$0xb3a29180]
  %37 = vrot.lane.b32.xlu0 %v36, 96
  %v38 = vpop.permute.xlu0 %37
  %vm39 = vcmask 130048
  %s40 = scalar_lea.vmem %s1, 2
  %41 = vst.msk [vmem:[%s40] ss:$8 sm:$0xf] %vm39, %v38
  %s42 = scalar_lea.vmem %s1, 2
  %43 = vst.msk [vmem:[%s42] ss:$8 sm:$0xf0] %vm39, %v38
  %s44 = scalar_lea.vmem %s0, 4
  %v45 = vld.sshfl [vmem:[%s44] sm:$0xff pattern:$0xb3a29180]
  %46 = vrot.lane.b32.xlu0 %v45, 96
  %v47 = vpop.permute.xlu0 %46
  %vm48 = vcmask 130048
  %s49 = scalar_lea.vmem %s1, 66
  %50 = vst.msk [vmem:[%s49] ss:$8 sm:$0xf] %vm48, %v47
  %s51 = scalar_lea.vmem %s1, 66
  %52 = vst.msk [vmem:[%s51] ss:$8 sm:$0xf0] %vm48, %v47
  %v53 = vld.sshfl [vmem:[%s0] sm:$0xff pattern:$0xb3a29180]
  %54 = vrot.lane.b32.xlu0 %v53, 80
  %v55 = vpop.permute.xlu0 %54
  %vm56 = vcmask 130048
  %s57 = scalar_lea.vmem %s1, 3
  %58 = vst.msk [vmem:[%s57] ss:$8 sm:$0xf] %vm56, %v55
  %s59 = scalar_lea.vmem %s1, 3
  %60 = vst.msk [vmem:[%s59] ss:$8 sm:$0xf0] %vm56, %v55
  %s61 = scalar_lea.vmem %s0, 4
  %v62 = vld.sshfl [vmem:[%s61] sm:$0xff pattern:$0xb3a29180]
  %63 = vrot.lane.b32.xlu0 %v62, 80
  %v64 = vpop.permute.xlu0 %63
  %vm65 = vcmask 130048
  %s66 = scalar_lea.vmem %s1, 67
  %67 = vst.msk [vmem:[%s66] ss:$8 sm:$0xf] %vm65, %v64
  %s68 = scalar_lea.vmem %s1, 67
  %69 = vst.msk [vmem:[%s68] ss:$8 sm:$0xf0] %vm65, %v64
  %v70 = vld.sshfl [vmem:[%s0] sm:$0xff pattern:$0xb3a29180]
  %71 = vrot.lane.b32.xlu0 %v70, 64
  %v72 = vpop.permute.xlu0 %71
  %vm73 = vcmask 130048
  %s74 = scalar_lea.vmem %s1, 4
  %75 = vst.msk [vmem:[%s74] ss:$8 sm:$0xf] %vm73, %v72
  %s76 = scalar_lea.vmem %s1, 4
  %77 = vst.msk [vmem:[%s76] ss:$8 sm:$0xf0] %vm73, %v72
  %s78 = scalar_lea.vmem %s0, 4
  %v79 = vld.sshfl [vmem:[%s78] sm:$0xff pattern:$0xb3a29180]
  %80 = vrot.lane.b32.xlu0 %v79, 64
  %v81 = vpop.permute.xlu0 %80
  %vm82 = vcmask 130048
  %s83 = scalar_lea.vmem %s1, 68
  %84 = vst.msk [vmem:[%s83] ss:$8 sm:$0xf] %vm82, %v81
  %s85 = scalar_lea.vmem %s1, 68
  %86 = vst.msk [vmem:[%s85] ss:$8 sm:$0xf0] %vm82, %v81
  %v87 = vld.sshfl [vmem:[%s0] sm:$0xff pattern:$0xb3a29180]
  %88 = vrot.lane.b32.xlu0 %v87, 48
  %v89 = vpop.permute.xlu0 %88
  %vm90 = vcmask 130048
  %s91 = scalar_lea.vmem %s1, 5
  %92 = vst.msk [vmem:[%s91] ss:$8 sm:$0xf] %vm90, %v89
  %s93 = scalar_lea.vmem %s1, 5
  %94 = vst.msk [vmem:[%s93] ss:$8 sm:$0xf0] %vm90, %v89
  %s95 = scalar_lea.vmem %s0, 4
  %v96 = vld.sshfl [vmem:[%s95] sm:$0xff pattern:$0xb3a29180]
  %97 = vrot.lane.b32.xlu0 %v96, 48
  %v98 = vpop.permute.xlu0 %97
  %vm99 = vcmask 130048
  %s100 = scalar_lea.vmem %s1, 69
  %101 = vst.msk [vmem:[%s100] ss:$8 sm:$0xf] %vm99, %v98
  %s102 = scalar_lea.vmem %s1, 69
  %103 = vst.msk [vmem:[%s102] ss:$8 sm:$0xf0] %vm99, %v98
  %v104 = vld.sshfl [vmem:[%s0] sm:$0xff pattern:$0xb3a29180]
  %105 = vrot.lane.b32.xlu0 %v104, 32
  %v106 = vpop.permute.xlu0 %105
  %vm107 = vcmask 130048
  %s108 = scalar_lea.vmem %s1, 6
  %109 = vst.msk [vmem:[%s108] ss:$8 sm:$0xf] %vm107, %v106
  %s110 = scalar_lea.vmem %s1, 6
  %111 = vst.msk [vmem:[%s110] ss:$8 sm:$0xf0] %vm107, %v106
  %s112 = scalar_lea.vmem %s0, 4
  %v113 = vld.sshfl [vmem:[%s112] sm:$0xff pattern:$0xb3a29180]
  %114 = vrot.lane.b32.xlu0 %v113, 32
  %v115 = vpop.permute.xlu0 %114
  %vm116 = vcmask 130048
  %s117 = scalar_lea.vmem %s1, 70
  %118 = vst.msk [vmem:[%s117] ss:$8 sm:$0xf] %vm116, %v115
  %s119 = scalar_lea.vmem %s1, 70
  %120 = vst.msk [vmem:[%s119] ss:$8 sm:$0xf0] %vm116, %v115
  %v121 = vld.sshfl [vmem:[%s0] sm:$0xff pattern:$0xb3a29180]
  %122 = vrot.lane.b32.xlu0 %v121, 16
  %v123 = vpop.permute.xlu0 %122
  %vm124 = vcmask 130048
  %s125 = scalar_lea.vmem %s1, 7
  %126 = vst.msk [vmem:[%s125] ss:$8 sm:$0xf] %vm124, %v123
  %s127 = scalar_lea.vmem %s1, 7
  %128 = vst.msk [vmem:[%s127] ss:$8 sm:$0xf0] %vm124, %v123
  %s129 = scalar_lea.vmem %s0, 4
  %v130 = vld.sshfl [vmem:[%s129] sm:$0xff pattern:$0xb3a29180]
  %131 = vrot.lane.b32.xlu0 %v130, 16
  %v132 = vpop.permute.xlu0 %131
  %vm133 = vcmask 130048
  %s134 = scalar_lea.vmem %s1, 71
  %135 = vst.msk [vmem:[%s134] ss:$8 sm:$0xf] %vm133, %v132
  %s136 = scalar_lea.vmem %s1, 71
  %137 = vst.msk [vmem:[%s136] ss:$8 sm:$0xf0] %vm133, %v132

// kernel: custom-call.2
$region0: #{custom-call.2}
  %s0 = inlined_call_operand.vmem [shape: f32[2,4,16,16], index: 0, kind: input, shape index: {}]
  %s1 = inlined_call_operand.vmem [shape: f32[2,4,16,16], index: 1, kind: input, shape index: {}]
  %s2 = inlined_call_operand.hbm [shape: c64[2,4,16,16], index: 2, kind: output, shape index: {}]
  %s3 = scalar_lea.hbm %s2, 128
  $region1: #{custom-call.2} parent=0
    #allocation0 [shape = 's32[1]{0}', space=sflag, size = 0x4, scoped, tag = 'scoped memory for custom-call.2']
    %4 = vsyncpa [#allocation0], 0
    %s6 = sshll.u32 %s0, 4
    %s7 = int_to_ptr.vmem [resolvable:$true] %s6
    %s8 = sshll.u32 %s2, 4
    %s9 = int_to_ptr.hbm [resolvable:$true] %s8
    %11 = dma.vmem_to_hbm [thread:$0]  %s7, 2048, %s9, [#allocation0]
    %13 = dma.done [#allocation0], 2048
    %14 = vsyncpa [#allocation0], 1
  $region2: #{custom-call.2} parent=0
    #allocation1 [shape = 's32[1]{0}', space=sflag, size = 0x4, scoped, tag = 'scoped memory for custom-call.2']
    %15 = vsyncpa [#allocation1], 0
    %s17 = sshll.u32 %s1, 4
    %s18 = int_to_ptr.vmem [resolvable:$true] %s17
    %s19 = sshll.u32 %s3, 4
    %s20 = int_to_ptr.hbm [resolvable:$true] %s19
    %22 = dma.vmem_to_hbm [thread:$0]  %s18, 2048, %s20, [#allocation1]
    %24 = dma.done [#allocation1], 2048
    %25 = vsyncpa [#allocation1], 1

// kernel: optaeg_v3.1
$region0: #{optaeg_v3.1}
  #allocation0 [shape = 'u32[]', space=smem, size = 0x4, offset = 0x4, fixed_abs, tag = 'smem constant byte address 0x4 - core index']
  #allocation1 [shape = 'u32[72,128]{1,0:T(1,128)}', space=vmem, size = 0x9000, scoped, tag = 'internal scratch']
  %s0 = inlined_call_operand.vmem [shape: f32[12], index: 0, kind: input, shape index: {}]
  %s1 = inlined_call_operand.vmem [shape: f32[2,8,256], index: 1, kind: input, shape index: {}]
  %s2 = inlined_call_operand.vmem [shape: f32[2,8,256], index: 2, kind: output, shape index: {}]
  %s3 = sld [smem:[#allocation0]]
  $region22: #{optaeg_v3.1} parent=0
    _
  %s5 = ssub.s32 1, %s3
  %s6 = scalar_select 0, %s5, %s3
  $region1: #{optaeg_v3.1} parent=0
    #allocation2 [shape = 'u8[512]{0}', space=smem, size = 0x200, scoped, tag = 'input window, operand 0, single buffered']
    #allocation3 [shape = 's32[1]{0}', space=sflag, size = 0x4, scoped, tag = 'scoped memory for optaeg_v3.1']
    %7 = vsyncpa [#allocation3], 0
    // Predicated region
    $region2: #{optaeg_v3.1} parent=1 // pred_check
      _
    $region3: #{optaeg_v3.1} parent=1 // pred_check_branch
      %9 = sbr.rel (0) target = $region5
    $region4: #{optaeg_v3.1} parent=1 // pred_region
      %11 = vsyncadd [#allocation3], 0
      %s13 = sshll.u32 %s0, 4
      %s14 = int_to_ptr.vmem [resolvable:$true] %s13
      %16 = dma.vmem_to_smem %s14, 16, [#allocation2], [#allocation3]
    $region5: #{optaeg_v3.1} parent=1 // pred_fallthru
      _
    // Predicated region
    $region6: #{optaeg_v3.1} parent=1 // pred_check
      _
    $region7: #{optaeg_v3.1} parent=1 // pred_check_branch
      %18 = sbr.rel (0) target = $region9
    $region8: #{optaeg_v3.1} parent=1 // pred_region
      _
    $region9: #{optaeg_v3.1} parent=1 // pred_fallthru
      _
    // Predicated region
    $region10: #{optaeg_v3.1} parent=1 // pred_check
      _
    $region11: #{optaeg_v3.1} parent=1 // pred_check_branch
      %20 = sbr.rel (0) target = $region13
    $region12: #{optaeg_v3.1} parent=1 // pred_region
      %22 = dma.done [#allocation3], 16
    $region13: #{optaeg_v3.1} parent=1 // pred_fallthru
      _
    %23 = sfence
    %s24 = sld [smem:[#allocation2]]
    %s25 = sld [smem:[#allocation2 + $0x1]]
    %s26 = sld [smem:[#allocation2 + $0x2]]
    %s27 = sld [smem:[#allocation2 + $0x3]]
    %s28 = sld [smem:[#allocation2 + $0x4]]
    %s29 = sld [smem:[#allocation2 + $0x5]]
    %s30 = sld [smem:[#allocation2 + $0x6]]
    %s31 = sld [smem:[#allocation2 + $0x7]]
    %s32 = sld [smem:[#allocation2 + $0x8]]
    %s33 = sld [smem:[#allocation2 + $0x9]]
    %s34 = sld [smem:[#allocation2 + $0xa]]
    %s35 = sld [smem:[#allocation2 + $0xb]]
    %v36 = vld [vmem:[%s1] sm:$0xff]
    %v37 = vld [vmem:[%s1 + $0x8] sm:$0xff]
    %s38 = scalar_lea.vmem %s1, 16
    %v39 = vld [vmem:[%s38] sm:$0xff]
    %v40 = vld [vmem:[%s38 + $0x8] sm:$0xff]
    %v41 = vmul.f32 %v36, %v36
    %v42 = vmul.f32 %v37, %v37
    %v43 = vmul.f32 %v39, %v39
    %v44 = vmul.f32 %v40, %v40
    %v45 = vadd.f32 %v41, %v43
    %v46 = vadd.f32 %v42, %v44
    %vm47 = vcmp.gt.f32.partialorder %v45, 0.0
    %vm48 = vcmp.gt.f32.partialorder %v46, 0.0
    %v49 = vsel %vm47, %v45, 1.0
    %v50 = vsel %vm48, %v46, 1.0
    %v51 = vrsqrt.pop %v49
    %v52 = vmul.f32 %v51, %v49
    %v53 = vmul.f32 %v52, %v51
    %v54 = vmul.f32 0.5, %v53
    %v55 = vsub.f32 1.5, %v54
    %v56 = vmul.f32 %v51, %v55
    %vm57 = vweird.f32 %v49
    %vm58 = vweird.f32 %v51
    %vm59 = vmor %vm57, %vm58
    %v60 = vsel %vm59, %v51, %v56
    %v61 = vrsqrt.pop %v50
    %v62 = vmul.f32 %v61, %v50
    %v63 = vmul.f32 %v62, %v61
    %v64 = vmul.f32 0.5, %v63
    %v65 = vsub.f32 1.5, %v64
    %v66 = vmul.f32 %v61, %v65
    %vm67 = vweird.f32 %v50
    %vm68 = vweird.f32 %v61
    %vm69 = vmor %vm67, %vm68
    %v70 = vsel %vm69, %v61, %v66
    %v71 = vmul.f32 %v45, %v60
    %v72 = vmul.f32 %v46, %v70
    %v73 = vtanh.pop %v71
    %v74 = vtanh.pop %v72
    %v75 = vmul.f32 %v73, %v60
    %v76 = vmul.f32 %v74, %v70
    %v77 = vmul.f32 %v75, %v36
    %v78 = vmul.f32 %v76, %v37
    %v79 = vmul.f32 %v75, %v39
    %v80 = vmul.f32 %v76, %v40
    %s81 = sadd.f32 %s26, 1.0
    %v82 = vstv %s81
    %v83 = vmul.f32 %v77, %v82
    %v84 = vmul.f32 %v78, %v82
    %v85 = vstv %s27
    %v86 = vmul.f32 %v79, %v85
    %v87 = vmul.f32 %v80, %v85
    %v88 = vsub.f32 %v83, %v86
    %v89 = vsub.f32 %v84, %v87
    %v90 = vmul.f32 %v77, %v85
    %v91 = vmul.f32 %v78, %v85
    %v92 = vmul.f32 %v79, %v82
    %v93 = vmul.f32 %v80, %v82
    %v94 = vadd.f32 %v90, %v92
    %v95 = vadd.f32 %v91, %v93
    %v96 = vstv %s24
    %v97 = vadd.f32 %v88, %v96
    %v98 = vadd.f32 %v89, %v96
    %v99 = vstv %s25
    %v100 = vadd.f32 %v94, %v99
    %v101 = vadd.f32 %v95, %v99
    %s102 = sadd.f32 %s30, 1.0
    %v103 = vstv %s102
    %v104 = vmul.f32 %v77, %v103
    %v105 = vmul.f32 %v78, %v103
    %v106 = vstv %s31
    %v107 = vmul.f32 %v79, %v106
    %v108 = vmul.f32 %v80, %v106
    %v109 = vsub.f32 %v104, %v107
    %v110 = vsub.f32 %v105, %v108
    %v111 = vmul.f32 %v77, %v106
    %v112 = vmul.f32 %v78, %v106
    %v113 = vmul.f32 %v79, %v103
    %v114 = vmul.f32 %v80, %v103
    %v115 = vadd.f32 %v111, %v113
    %v116 = vadd.f32 %v112, %v114
    %v117 = vstv %s28
    %v118 = vadd.f32 %v109, %v117
    %v119 = vadd.f32 %v110, %v117
    %v120 = vstv %s29
    %v121 = vadd.f32 %v115, %v120
    %v122 = vadd.f32 %v116, %v120
    %v123 = vtanh.pop %v118
    %v124 = vtanh.pop %v119
    %v125 = vmul.f32 %v123, %v123
    %v126 = vmul.f32 %v124, %v124
    %v127 = vsub.f32 1.0, %v125
    %v128 = vsub.f32 1.0, %v126
    %v129 = vadd.f32 %v125, 1.0
    %v130 = vadd.f32 %v126, 1.0
    %v131 = vmul.f32 %v121, 2.0
    %v132 = vmul.f32 %v122, 2.0
    %v133 = vand.u32 2147483647, %v131
    %vm134 = vcmp.le.f32.partialorder %v133, 0.7853982
    %vm135 = vcmp.lt.s32.totalorder %v131, 0
    %v136 = vand.u32 %v131, 2139095040
    %v137 = vshrl.u32 %v136, 23
    %v138 = vsub.s32 %v137, 127
    %v139 = vand.u32 2147483647, %v131
    %v140 = vand.u32 %v139, 8388607
    %v141 = vor.u32 %v140, 8388608
    %v142 = vsub.s32 0, %v141
    %v143 = vadd.s32 %v138, 1
    %vm144 = vcmp.gt.s32.totalorder %v143, 0
    %v145 = vsel %vm144, %v143, 0
    %v146 = vshrl.u32 %v145, 5
    %v147 = vand.u32 %v145, 31
    %v148 = vsub.s32 32, %v147
    %v149 = vshrl.u32 683565275, %v148
    %v150 = vshll.u32 683565275, %v147
    %v151 = vshrl.u32 2475754826, %v148
    %v152 = vor.u32 %v150, %v151
    %v153 = vshll.u32 2475754826, %v147
    %v154 = vshrl.u32 2131351028, %v148
    %v155 = vor.u32 %v153, %v154
    %v156 = vshll.u32 2131351028, %v147
    %v157 = vshrl.u32 2102212464, %v148
    %v158 = vor.u32 %v156, %v157
    %v159 = vshll.u32 2102212464, %v147
    %v160 = vshrl.u32 920167782, %v148
    %v161 = vor.u32 %v159, %v160
    %v162 = vshll.u32 920167782, %v147
    %v163 = vshrl.u32 1326507024, %v148
    %v164 = vor.u32 %v162, %v163
    %vm165 = vcmp.lt.s32.totalorder %v146, 1
    %vm166 = vcmp.lt.s32.totalorder %v146, 2
    %vm167 = vcmp.lt.s32.totalorder %v146, 3
    %vm168 = vcmp.lt.s32.totalorder %v146, 4
    %v169 = vsel %vm165, %v149, %v152
    %v170 = vsel %vm168, %v158, 2102212464
    %v171 = vsel %vm167, %v155, %v170
    %v172 = vsel %vm166, %v169, %v171
    %v173 = vsel %vm165, %v152, %v155
    %v174 = vsel %vm168, %v161, 920167782
    %v175 = vsel %vm167, %v158, %v174
    %v176 = vsel %vm166, %v173, %v175
    %v177 = vsel %vm165, %v155, %v158
    %v178 = vsel %vm168, %v164, 1326507024
    %v179 = vsel %vm167, %v161, %v178
    %v180 = vsel %vm166, %v177, %v179
    %v181 = vshll.u32 %v141, 8
    %v182 = vand.u32 %v181, 65535
    %v183 = vshrl.u32 %v181, 16
    %v184 = vand.u32 %v180, 65535
    %v185 = vshrl.u32 %v180, 16
    %v186 = vmul.u32 %v182, %v184
    %v187 = vmul.u32 %v182, %v185
    %v188 = vmul.u32 %v183, %v184
    %v189 = vmul.u32 %v183, %v185
    %v190 = vshll.u32 %v187, 16
    %v191 = vshrl.u32 %v187, 16
    %v192 = vshll.u32 %v188, 16
    %v193 = vshrl.u32 %v188, 16
    %vm194 = vc.u32 %v186, %v190
    %v195 = vsel %vm194, 1, 0
    %v196 = vadd.s32 %v186, %v190
    %v197 = vadd.s32 %v189, %v195
    %vm198 = vc.u32 %v196, %v192
    %v199 = vsel %vm198, 1, 0
    %v200 = vadd.s32 %v196, %v192
    %v201 = vadd.s32 %v197, %v199
    %v202 = vadd.s32 %v201, %v191
    %v203 = vadd.s32 %v202, %v193
    %v204 = vand.u32 %v181, 65535
    %v205 = vshrl.u32 %v181, 16
    %v206 = vand.u32 %v176, 65535
    %v207 = vshrl.u32 %v176, 16
    %v208 = vmul.u32 %v204, %v206
    %v209 = vmul.u32 %v204, %v207
    %v210 = vmul.u32 %v205, %v206
    %v211 = vmul.u32 %v205, %v207
    %v212 = vshll.u32 %v209, 16
    %v213 = vshrl.u32 %v209, 16
    %v214 = vshll.u32 %v210, 16
    %v215 = vshrl.u32 %v210, 16
    %vm216 = vc.u32 %v208, %v212
    %v217 = vsel %vm216, 1, 0
    %v218 = vadd.s32 %v208, %v212
    %v219 = vadd.s32 %v211, %v217
    %vm220 = vc.u32 %v218, %v214
    %v221 = vsel %vm220, 1, 0
    %v222 = vadd.s32 %v218, %v214
    %v223 = vadd.s32 %v219, %v221
    %v224 = vadd.s32 %v223, %v213
    %v225 = vadd.s32 %v224, %v215
    %v226 = vmul.u32 %v181, %v172
    %v227 = vadd.s32 %v203, %v222
    %vm228 = vc.u32 %v203, %v222
    %v229 = vadd.s32 %v225, 1
    %v230 = vsel %vm228, %v229, %v225
    %v231 = vadd.s32 %v226, %v230
    %v232 = vadd.s32 %v231, 536870912
    %v233 = vshrl.u32 %v232, 30
    %v234 = vshll.u32 %v233, 30
    %v235 = vsub.s32 %v231, %v234
    %vm236 = vcmp.lt.s32.totalorder %v235, 0
    %v237 = vsub.s32 0, %v235
    %v238 = vsel %vm236, %v237, %v235
    %v239 = vclz %v238
    %v240 = vsub.s32 %v239, 2
    %vm241 = vcmp.gt.s32.totalorder 0, %v240
    %v242 = vsel %vm241, 0, %v240
    %v243 = vsub.s32 32, %v242
    %v244 = vshll.u32 %v235, %v242
    %v245 = vshrl.u32 %v227, %v243
    %v246 = vor.u32 %v244, %v245
    %v247 = vsub.s32 4294967266, %v242
    %v248 = vadd.s32 %v247, 127
    %v249 = vshll.u32 %v248, 23
    %v250 = vor.u32 4788187, %v249
    %v251 = vand.u32 2147483647, %v250
    %v253 = vcvt.s32.f32 %v246
    %v254 = vmul.f32 %v253, %v251
    %v255 = vxor.u32 %v254, 2147483648
    %v256 = vsel %vm135, %v255, %v254
    %v257 = vsub.s32 4, %v233
    %v258 = vsel %vm135, %v257, %v233
    %v259 = vsel %vm134, %v131, %v256
    %v260 = vsel %vm134, 0, %v258
    %v261 = vmul.f32 %v259, %v259
    %v262 = vmul.f32 %v261, -0.001358992
    %v263 = vadd.f32 %v262, 0.041655596
    %v264 = vmul.f32 %v261, %v263
    %v265 = vadd.f32 %v264, -0.4999988
    %v266 = vmul.f32 %v261, %v265
    %v267 = vadd.f32 1.0, %v266
    %v268 = vmul.f32 %v259, %v259
    %v269 = vmul.f32 %v268, -0.00019511016
    %v270 = vadd.f32 %v269, 0.008332121
    %v271 = vmul.f32 %v268, %v270
    %v272 = vadd.f32 %v271, -0.16666654
    %v273 = vmul.f32 %v268, %v272
    %v274 = vadd.f32 %v273, 1.0
    %v275 = vmul.f32 %v274, %v259
    %vm276 = vweird.f32 %v131
    %v277 = vand.u32 %v260, 3
    %vm278 = vcmp.lt.s32.totalorder %v277, 2
    %vm279 = vcmp.eq.s32.totalorder %v277, 0
    %v280 = vxor.u32 %v275, 2147483648
    %v281 = vsel %vm279, %v267, %v280
    %vm282 = vcmp.eq.s32.totalorder %v277, 2
    %v283 = vxor.u32 %v267, 2147483648
    %v284 = vsel %vm282, %v283, %v275
    %v285 = vsel %vm278, %v281, %v284
    %v286 = vsel %vm276, nan, %v285
    %v287 = vand.u32 2147483647, %v132
    %vm288 = vcmp.le.f32.partialorder %v287, 0.7853982
    %vm289 = vcmp.lt.s32.totalorder %v132, 0
    %v290 = vand.u32 %v132, 2139095040
    %v291 = vshrl.u32 %v290, 23
    %v292 = vsub.s32 %v291, 127
    %v293 = vand.u32 2147483647, %v132
    %v294 = vand.u32 %v293, 8388607
    %v295 = vor.u32 %v294, 8388608
    %v296 = vsub.s32 0, %v295
    %v297 = vadd.s32 %v292, 1
    %vm298 = vcmp.gt.s32.totalorder %v297, 0
    %v299 = vsel %vm298, %v297, 0
    %v300 = vshrl.u32 %v299, 5
    %v301 = vand.u32 %v299, 31
    %v302 = vsub.s32 32, %v301
    %v303 = vshrl.u32 683565275, %v302
    %v304 = vshll.u32 683565275, %v301
    %v305 = vshrl.u32 2475754826, %v302
    %v306 = vor.u32 %v304, %v305
    %v307 = vshll.u32 2475754826, %v301
    %v308 = vshrl.u32 2131351028, %v302
    %v309 = vor.u32 %v307, %v308
    %v310 = vshll.u32 2131351028, %v301
    %v311 = vshrl.u32 2102212464, %v302
    %v312 = vor.u32 %v310, %v311
    %v313 = vshll.u32 2102212464, %v301
    %v314 = vshrl.u32 920167782, %v302
    %v315 = vor.u32 %v313, %v314
    %v316 = vshll.u32 920167782, %v301
    %v317 = vshrl.u32 1326507024, %v302
    %v318 = vor.u32 %v316, %v317
    %vm319 = vcmp.lt.s32.totalorder %v300, 1
    %vm320 = vcmp.lt.s32.totalorder %v300, 2
    %vm321 = vcmp.lt.s32.totalorder %v300, 3
    %vm322 = vcmp.lt.s32.totalorder %v300, 4
    %v323 = vsel %vm319, %v303, %v306
    %v324 = vsel %vm322, %v312, 2102212464
    %v325 = vsel %vm321, %v309, %v324
    %v326 = vsel %vm320, %v323, %v325
    %v327 = vsel %vm319, %v306, %v309
    %v328 = vsel %vm322, %v315, 920167782
    %v329 = vsel %vm321, %v312, %v328
    %v330 = vsel %vm320, %v327, %v329
    %v331 = vsel %vm319, %v309, %v312
    %v332 = vsel %vm322, %v318, 1326507024
    %v333 = vsel %vm321, %v315, %v332
    %v334 = vsel %vm320, %v331, %v333
    %v335 = vshll.u32 %v295, 8
    %v336 = vand.u32 %v335, 65535
    %v337 = vshrl.u32 %v335, 16
    %v338 = vand.u32 %v334, 65535
    %v339 = vshrl.u32 %v334, 16
    %v340 = vmul.u32 %v336, %v338
    %v341 = vmul.u32 %v336, %v339
    %v342 = vmul.u32 %v337, %v338
    %v343 = vmul.u32 %v337, %v339
    %v344 = vshll.u32 %v341, 16
    %v345 = vshrl.u32 %v341, 16
    %v346 = vshll.u32 %v342, 16
    %v347 = vshrl.u32 %v342, 16
    %vm348 = vc.u32 %v340, %v344
    %v349 = vsel %vm348, 1, 0
    %v350 = vadd.s32 %v340, %v344
    %v351 = vadd.s32 %v343, %v349
    %vm352 = vc.u32 %v350, %v346
    %v353 = vsel %vm352, 1, 0
    %v354 = vadd.s32 %v350, %v346
    %v355 = vadd.s32 %v351, %v353
    %v356 = vadd.s32 %v355, %v345
    %v357 = vadd.s32 %v356, %v347
    %v358 = vand.u32 %v335, 65535
    %v359 = vshrl.u32 %v335, 16
    %v360 = vand.u32 %v330, 65535
    %v361 = vshrl.u32 %v330, 16
    %v362 = vmul.u32 %v358, %v360
    %v363 = vmul.u32 %v358, %v361
    %v364 = vmul.u32 %v359, %v360
    %v365 = vmul.u32 %v359, %v361
    %v366 = vshll.u32 %v363, 16
    %v367 = vshrl.u32 %v363, 16
    %v368 = vshll.u32 %v364, 16
    %v369 = vshrl.u32 %v364, 16
    %vm370 = vc.u32 %v362, %v366
    %v371 = vsel %vm370, 1, 0
    %v372 = vadd.s32 %v362, %v366
    %v373 = vadd.s32 %v365, %v371
    %vm374 = vc.u32 %v372, %v368
    %v375 = vsel %vm374, 1, 0
    %v376 = vadd.s32 %v372, %v368
    %v377 = vadd.s32 %v373, %v375
    %v378 = vadd.s32 %v377, %v367
    %v379 = vadd.s32 %v378, %v369
    %v380 = vmul.u32 %v335, %v326
    %v381 = vadd.s32 %v357, %v376
    %vm382 = vc.u32 %v357, %v376
    %v383 = vadd.s32 %v379, 1
    %v384 = vsel %vm382, %v383, %v379
    %v385 = vadd.s32 %v380, %v384
    %v386 = vadd.s32 %v385, 536870912
    %v387 = vshrl.u32 %v386, 30
    %v388 = vshll.u32 %v387, 30
    %v389 = vsub.s32 %v385, %v388
    %vm390 = vcmp.lt.s32.totalorder %v389, 0
    %v391 = vsub.s32 0, %v389
    %v392 = vsel %vm390, %v391, %v389
    %v393 = vclz %v392
    %v394 = vsub.s32 %v393, 2
    %vm395 = vcmp.gt.s32.totalorder 0, %v394
    %v396 = vsel %vm395, 0, %v394
    %v397 = vsub.s32 32, %v396
    %v398 = vshll.u32 %v389, %v396
    %v399 = vshrl.u32 %v381, %v397
    %v400 = vor.u32 %v398, %v399
    %v401 = vsub.s32 4294967266, %v396
    %v402 = vadd.s32 %v401, 127
    %v403 = vshll.u32 %v402, 23
    %v404 = vor.u32 4788187, %v403
    %v405 = vand.u32 2147483647, %v404
    %v407 = vcvt.s32.f32 %v400
    %v408 = vmul.f32 %v407, %v405
    %v409 = vxor.u32 %v408, 2147483648
    %v410 = vsel %vm289, %v409, %v408
    %v411 = vsub.s32 4, %v387
    %v412 = vsel %vm289, %v411, %v387
    %v413 = vsel %vm288, %v132, %v410
    %v414 = vsel %vm288, 0, %v412
    %v415 = vmul.f32 %v413, %v413
    %v416 = vmul.f32 %v415, -0.001358992
    %v417 = vadd.f32 %v416, 0.041655596
    %v418 = vmul.f32 %v415, %v417
    %v419 = vadd.f32 %v418, -0.4999988
    %v420 = vmul.f32 %v415, %v419
    %v421 = vadd.f32 1.0, %v420
    %v422 = vmul.f32 %v413, %v413
    %v423 = vmul.f32 %v422, -0.00019511016
    %v424 = vadd.f32 %v423, 0.008332121
    %v425 = vmul.f32 %v422, %v424
    %v426 = vadd.f32 %v425, -0.16666654
    %v427 = vmul.f32 %v422, %v426
    %v428 = vadd.f32 %v427, 1.0
    %v429 = vmul.f32 %v428, %v413
    %vm430 = vweird.f32 %v132
    %v431 = vand.u32 %v414, 3
    %vm432 = vcmp.lt.s32.totalorder %v431, 2
    %vm433 = vcmp.eq.s32.totalorder %v431, 0
    %v434 = vxor.u32 %v429, 2147483648
    %v435 = vsel %vm433, %v421, %v434
    %vm436 = vcmp.eq.s32.totalorder %v431, 2
    %v437 = vxor.u32 %v421, 2147483648
    %v438 = vsel %vm436, %v437, %v429
    %v439 = vsel %vm432, %v435, %v438
    %v440 = vsel %vm430, nan, %v439
    %v441 = vand.u32 2147483647, %v131
    %vm442 = vcmp.le.f32.partialorder %v441, 0.7853982
    %vm443 = vcmp.lt.s32.totalorder %v131, 0
    %v444 = vand.u32 %v131, 2139095040
    %v445 = vshrl.u32 %v444, 23
    %v446 = vsub.s32 %v445, 127
    %v447 = vand.u32 2147483647, %v131
    %v448 = vand.u32 %v447, 8388607
    %v449 = vor.u32 %v448, 8388608
    %v450 = vsub.s32 0, %v449
    %v451 = vadd.s32 %v446, 1
    %vm452 = vcmp.gt.s32.totalorder %v451, 0
    %v453 = vsel %vm452, %v451, 0
    %v454 = vshrl.u32 %v453, 5
    %v455 = vand.u32 %v453, 31
    %v456 = vsub.s32 32, %v455
    %v457 = vshrl.u32 683565275, %v456
    %v458 = vshll.u32 683565275, %v455
    %v459 = vshrl.u32 2475754826, %v456
    %v460 = vor.u32 %v458, %v459
    %v461 = vshll.u32 2475754826, %v455
    %v462 = vshrl.u32 2131351028, %v456
    %v463 = vor.u32 %v461, %v462
    %v464 = vshll.u32 2131351028, %v455
    %v465 = vshrl.u32 2102212464, %v456
    %v466 = vor.u32 %v464, %v465
    %v467 = vshll.u32 2102212464, %v455
    %v468 = vshrl.u32 920167782, %v456
    %v469 = vor.u32 %v467, %v468
    %v470 = vshll.u32 920167782, %v455
    %v471 = vshrl.u32 1326507024, %v456
    %v472 = vor.u32 %v470, %v471
    %vm473 = vcmp.lt.s32.totalorder %v454, 1
    %vm474 = vcmp.lt.s32.totalorder %v454, 2
    %vm475 = vcmp.lt.s32.totalorder %v454, 3
    %vm476 = vcmp.lt.s32.totalorder %v454, 4
    %v477 = vsel %vm473, %v457, %v460
    %v478 = vsel %vm476, %v466, 2102212464
    %v479 = vsel %vm475, %v463, %v478
    %v480 = vsel %vm474, %v477, %v479
    %v481 = vsel %vm473, %v460, %v463
    %v482 = vsel %vm476, %v469, 920167782
    %v483 = vsel %vm475, %v466, %v482
    %v484 = vsel %vm474, %v481, %v483
    %v485 = vsel %vm473, %v463, %v466
    %v486 = vsel %vm476, %v472, 1326507024
    %v487 = vsel %vm475, %v469, %v486
    %v488 = vsel %vm474, %v485, %v487
    %v489 = vshll.u32 %v449, 8
    %v490 = vand.u32 %v489, 65535
    %v491 = vshrl.u32 %v489, 16
    %v492 = vand.u32 %v488, 65535
    %v493 = vshrl.u32 %v488, 16
    %v494 = vmul.u32 %v490, %v492
    %v495 = vmul.u32 %v490, %v493
    %v496 = vmul.u32 %v491, %v492
    %v497 = vmul.u32 %v491, %v493
    %v498 = vshll.u32 %v495, 16
    %v499 = vshrl.u32 %v495, 16
    %v500 = vshll.u32 %v496, 16
    %v501 = vshrl.u32 %v496, 16
    %vm502 = vc.u32 %v494, %v498
    %v503 = vsel %vm502, 1, 0
    %v504 = vadd.s32 %v494, %v498
    %v505 = vadd.s32 %v497, %v503
    %vm506 = vc.u32 %v504, %v500
    %v507 = vsel %vm506, 1, 0
    %v508 = vadd.s32 %v504, %v500
    %v509 = vadd.s32 %v505, %v507
    %v510 = vadd.s32 %v509, %v499
    %v511 = vadd.s32 %v510, %v501
    %v512 = vand.u32 %v489, 65535
    %v513 = vshrl.u32 %v489, 16
    %v514 = vand.u32 %v484, 65535
    %v515 = vshrl.u32 %v484, 16
    %v516 = vmul.u32 %v512, %v514
    %v517 = vmul.u32 %v512, %v515
    %v518 = vmul.u32 %v513, %v514
    %v519 = vmul.u32 %v513, %v515
    %v520 = vshll.u32 %v517, 16
    %v521 = vshrl.u32 %v517, 16
    %v522 = vshll.u32 %v518, 16
    %v523 = vshrl.u32 %v518, 16
    %vm524 = vc.u32 %v516, %v520
    %v525 = vsel %vm524, 1, 0
    %v526 = vadd.s32 %v516, %v520
    %v527 = vadd.s32 %v519, %v525
    %vm528 = vc.u32 %v526, %v522
    %v529 = vsel %vm528, 1, 0
    %v530 = vadd.s32 %v526, %v522
    %v531 = vadd.s32 %v527, %v529
    %v532 = vadd.s32 %v531, %v521
    %v533 = vadd.s32 %v532, %v523
    %v534 = vmul.u32 %v489, %v480
    %v535 = vadd.s32 %v511, %v530
    %vm536 = vc.u32 %v511, %v530
    %v537 = vadd.s32 %v533, 1
    %v538 = vsel %vm536, %v537, %v533
    %v539 = vadd.s32 %v534, %v538
    %v540 = vadd.s32 %v539, 536870912
    %v541 = vshrl.u32 %v540, 30
    %v542 = vshll.u32 %v541, 30
    %v543 = vsub.s32 %v539, %v542
    %vm544 = vcmp.lt.s32.totalorder %v543, 0
    %v545 = vsub.s32 0, %v543
    %v546 = vsel %vm544, %v545, %v543
    %v547 = vclz %v546
    %v548 = vsub.s32 %v547, 2
    %vm549 = vcmp.gt.s32.totalorder 0, %v548
    %v550 = vsel %vm549, 0, %v548
    %v551 = vsub.s32 32, %v550
    %v552 = vshll.u32 %v543, %v550
    %v553 = vshrl.u32 %v535, %v551
    %v554 = vor.u32 %v552, %v553
    %v555 = vsub.s32 4294967266, %v550
    %v556 = vadd.s32 %v555, 127
    %v557 = vshll.u32 %v556, 23
    %v558 = vor.u32 4788187, %v557
    %v559 = vand.u32 2147483647, %v558
    %v561 = vcvt.s32.f32 %v554
    %v562 = vmul.f32 %v561, %v559
    %v563 = vxor.u32 %v562, 2147483648
    %v564 = vsel %vm443, %v563, %v562
    %v565 = vsub.s32 4, %v541
    %v566 = vsel %vm443, %v565, %v541
    %v567 = vsel %vm442, %v131, %v564
    %v568 = vsel %vm442, 0, %v566
    %v569 = vmul.f32 %v567, %v567
    %v570 = vmul.f32 %v569, -0.001358992
    %v571 = vadd.f32 %v570, 0.041655596
    %v572 = vmul.f32 %v569, %v571
    %v573 = vadd.f32 %v572, -0.4999988
    %v574 = vmul.f32 %v569, %v573
    %v575 = vadd.f32 1.0, %v574
    %v576 = vmul.f32 %v567, %v567
    %v577 = vmul.f32 %v576, -0.00019511016
    %v578 = vadd.f32 %v577, 0.008332121
    %v579 = vmul.f32 %v576, %v578
    %v580 = vadd.f32 %v579, -0.16666654
    %v581 = vmul.f32 %v576, %v580
    %v582 = vadd.f32 %v581, 1.0
    %v583 = vmul.f32 %v582, %v567
    %vm584 = vweird.f32 %v131
    %v585 = vadd.s32 %v568, 3
    %v586 = vand.u32 %v585, 3
    %vm587 = vcmp.lt.s32.totalorder %v586, 2
    %vm588 = vcmp.eq.s32.totalorder %v586, 0
    %v589 = vxor.u32 %v583, 2147483648
    %v590 = vsel %vm588, %v575, %v589
    %vm591 = vcmp.eq.s32.totalorder %v586, 2
    %v592 = vxor.u32 %v575, 2147483648
    %v593 = vsel %vm591, %v592, %v583
    %v594 = vsel %vm587, %v590, %v593
    %v595 = vsel %vm584, nan, %v594
    %v596 = vand.u32 2147483647, %v132
    %vm597 = vcmp.le.f32.partialorder %v596, 0.7853982
    %vm598 = vcmp.lt.s32.totalorder %v132, 0
    %v599 = vand.u32 %v132, 2139095040
    %v600 = vshrl.u32 %v599, 23
    %v601 = vsub.s32 %v600, 127
    %v602 = vand.u32 2147483647, %v132
    %v603 = vand.u32 %v602, 8388607
    %v604 = vor.u32 %v603, 8388608
    %v605 = vsub.s32 0, %v604
    %v606 = vadd.s32 %v601, 1
    %vm607 = vcmp.gt.s32.totalorder %v606, 0
    %v608 = vsel %vm607, %v606, 0
    %v609 = vshrl.u32 %v608, 5
    %v610 = vand.u32 %v608, 31
    %v611 = vsub.s32 32, %v610
    %v612 = vshrl.u32 683565275, %v611
    %v613 = vshll.u32 683565275, %v610
    %v614 = vshrl.u32 2475754826, %v611
    %v615 = vor.u32 %v613, %v614
    %v616 = vshll.u32 2475754826, %v610
    %v617 = vshrl.u32 2131351028, %v611
    %v618 = vor.u32 %v616, %v617
    %v619 = vshll.u32 2131351028, %v610
    %v620 = vshrl.u32 2102212464, %v611
    %v621 = vor.u32 %v619, %v620
    %v622 = vshll.u32 2102212464, %v610
    %v623 = vshrl.u32 920167782, %v611
    %v624 = vor.u32 %v622, %v623
    %v625 = vshll.u32 920167782, %v610
    %v626 = vshrl.u32 1326507024, %v611
    %v627 = vor.u32 %v625, %v626
    %vm628 = vcmp.lt.s32.totalorder %v609, 1
    %vm629 = vcmp.lt.s32.totalorder %v609, 2
    %vm630 = vcmp.lt.s32.totalorder %v609, 3
    %vm631 = vcmp.lt.s32.totalorder %v609, 4
    %v632 = vsel %vm628, %v612, %v615
    %v633 = vsel %vm631, %v621, 2102212464
    %v634 = vsel %vm630, %v618, %v633
    %v635 = vsel %vm629, %v632, %v634
    %v636 = vsel %vm628, %v615, %v618
    %v637 = vsel %vm631, %v624, 920167782
    %v638 = vsel %vm630, %v621, %v637
    %v639 = vsel %vm629, %v636, %v638
    %v640 = vsel %vm628, %v618, %v621
    %v641 = vsel %vm631, %v627, 1326507024
    %v642 = vsel %vm630, %v624, %v641
    %v643 = vsel %vm629, %v640, %v642
    %v644 = vshll.u32 %v604, 8
    %v645 = vand.u32 %v644, 65535
    %v646 = vshrl.u32 %v644, 16
    %v647 = vand.u32 %v643, 65535
    %v648 = vshrl.u32 %v643, 16
    %v649 = vmul.u32 %v645, %v647
    %v650 = vmul.u32 %v645, %v648
    %v651 = vmul.u32 %v646, %v647
    %v652 = vmul.u32 %v646, %v648
    %v653 = vshll.u32 %v650, 16
    %v654 = vshrl.u32 %v650, 16
    %v655 = vshll.u32 %v651, 16
    %v656 = vshrl.u32 %v651, 16
    %vm657 = vc.u32 %v649, %v653
    %v658 = vsel %vm657, 1, 0
    %v659 = vadd.s32 %v649, %v653
    %v660 = vadd.s32 %v652, %v658
    %vm661 = vc.u32 %v659, %v655
    %v662 = vsel %vm661, 1, 0
    %v663 = vadd.s32 %v659, %v655
    %v664 = vadd.s32 %v660, %v662
    %v665 = vadd.s32 %v664, %v654
    %v666 = vadd.s32 %v665, %v656
    %v667 = vand.u32 %v644, 65535
    %v668 = vshrl.u32 %v644, 16
    %v669 = vand.u32 %v639, 65535
    %v670 = vshrl.u32 %v639, 16
    %v671 = vmul.u32 %v667, %v669
    %v672 = vmul.u32 %v667, %v670
    %v673 = vmul.u32 %v668, %v669
    %v674 = vmul.u32 %v668, %v670
    %v675 = vshll.u32 %v672, 16
    %v676 = vshrl.u32 %v672, 16
    %v677 = vshll.u32 %v673, 16
    %v678 = vshrl.u32 %v673, 16
    %vm679 = vc.u32 %v671, %v675
    %v680 = vsel %vm679, 1, 0
    %v681 = vadd.s32 %v671, %v675
    %v682 = vadd.s32 %v674, %v680
    %vm683 = vc.u32 %v681, %v677
    %v684 = vsel %vm683, 1, 0
    %v685 = vadd.s32 %v681, %v677
    %v686 = vadd.s32 %v682, %v684
    %v687 = vadd.s32 %v686, %v676
    %v688 = vadd.s32 %v687, %v678
    %v689 = vmul.u32 %v644, %v635
    %v690 = vadd.s32 %v666, %v685
    %vm691 = vc.u32 %v666, %v685
    %v692 = vadd.s32 %v688, 1
    %v693 = vsel %vm691, %v692, %v688
    %v694 = vadd.s32 %v689, %v693
    %v695 = vadd.s32 %v694, 536870912
    %v696 = vshrl.u32 %v695, 30
    %v697 = vshll.u32 %v696, 30
    %v698 = vsub.s32 %v694, %v697
    %vm699 = vcmp.lt.s32.totalorder %v698, 0
    %v700 = vsub.s32 0, %v698
    %v701 = vsel %vm699, %v700, %v698
    %v702 = vclz %v701
    %v703 = vsub.s32 %v702, 2
    %vm704 = vcmp.gt.s32.totalorder 0, %v703
    %v705 = vsel %vm704, 0, %v703
    %v706 = vsub.s32 32, %v705
    %v707 = vshll.u32 %v698, %v705
    %v708 = vshrl.u32 %v690, %v706
    %v709 = vor.u32 %v707, %v708
    %v710 = vsub.s32 4294967266, %v705
    %v711 = vadd.s32 %v710, 127
    %v712 = vshll.u32 %v711, 23
    %v713 = vor.u32 4788187, %v712
    %v714 = vand.u32 2147483647, %v713
    %v716 = vcvt.s32.f32 %v709
    %v717 = vmul.f32 %v716, %v714
    %v718 = vxor.u32 %v717, 2147483648
    %v719 = vsel %vm598, %v718, %v717
    %v720 = vsub.s32 4, %v696
    %v721 = vsel %vm598, %v720, %v696
    %v722 = vsel %vm597, %v132, %v719
    %v723 = vsel %vm597, 0, %v721
    %v724 = vmul.f32 %v722, %v722
    %v725 = vmul.f32 %v724, -0.001358992
    %v726 = vadd.f32 %v725, 0.041655596
    %v727 = vmul.f32 %v724, %v726
    %v728 = vadd.f32 %v727, -0.4999988
    %v729 = vmul.f32 %v724, %v728
    %v730 = vadd.f32 1.0, %v729
    %v731 = vmul.f32 %v722, %v722
    %v732 = vmul.f32 %v731, -0.00019511016
    %v733 = vadd.f32 %v732, 0.008332121
    %v734 = vmul.f32 %v731, %v733
    %v735 = vadd.f32 %v734, -0.16666654
    %v736 = vmul.f32 %v731, %v735
    %v737 = vadd.f32 %v736, 1.0
    %v738 = vmul.f32 %v737, %v722
    %vm739 = vweird.f32 %v132
    %v740 = vadd.s32 %v723, 3
    %v741 = vand.u32 %v740, 3
    %vm742 = vcmp.lt.s32.totalorder %v741, 2
    %vm743 = vcmp.eq.s32.totalorder %v741, 0
    %v744 = vxor.u32 %v738, 2147483648
    %v745 = vsel %vm743, %v730, %v744
    %vm746 = vcmp.eq.s32.totalorder %v741, 2
    %v747 = vxor.u32 %v730, 2147483648
    %v748 = vsel %vm746, %v747, %v738
    %v749 = vsel %vm742, %v745, %v748
    %v750 = vsel %vm739, nan, %v749
    %v751 = vmul.f32 %v286, %v127
    %v752 = vmul.f32 %v440, %v128
    %v753 = vadd.f32 %v129, %v751
    %v754 = vadd.f32 %v130, %v752
    %v755 = vrcp.pop %v753
    %v756 = vrcp.pop %v754
    %v757 = vmul.f32 %v123, 2.0
    %v758 = vmul.f32 %v124, 2.0
    %v759 = vmul.f32 %v757, %v755
    %v760 = vmul.f32 %v758, %v756
    %v761 = vmul.f32 %v595, %v127
    %v762 = vmul.f32 %v750, %v128
    %v763 = vmul.f32 %v761, %v755
    %v764 = vmul.f32 %v762, %v756
    %v765 = vmul.f32 %v97, %v759
    %v766 = vmul.f32 %v98, %v760
    %v767 = vmul.f32 %v100, %v763
    %v768 = vmul.f32 %v101, %v764
    %v769 = vsub.f32 %v765, %v767
    %v770 = vsub.f32 %v766, %v768
    %v771 = vmul.f32 %v97, %v763
    %v772 = vmul.f32 %v98, %v764
    %v773 = vmul.f32 %v100, %v759
    %v774 = vmul.f32 %v101, %v760
    %v775 = vadd.f32 %v771, %v773
    %v776 = vadd.f32 %v772, %v774
    %v777 = vstv %s32
    %v778 = vmul.f32 %v777, %v769
    %v779 = vmul.f32 %v777, %v770
    %v780 = vstv %s33
    %v781 = vmul.f32 %v780, %v775
    %v782 = vmul.f32 %v780, %v776
    %v783 = vsub.f32 %v778, %v781
    %v784 = vsub.f32 %v779, %v782
    %v785 = vmul.f32 %v777, %v775
    %v786 = vmul.f32 %v777, %v776
    %v787 = vmul.f32 %v780, %v769
    %v788 = vmul.f32 %v780, %v770
    %v789 = vadd.f32 %v785, %v787
    %v790 = vadd.f32 %v786, %v788
    %v791 = vtanh.pop %v77
    %v792 = vtanh.pop %v78
    %v793 = vmul.f32 %v791, %v791
    %v794 = vmul.f32 %v792, %v792
    %v795 = vsub.f32 1.0, %v793
    %v796 = vsub.f32 1.0, %v794
    %v797 = vadd.f32 %v793, 1.0
    %v798 = vadd.f32 %v794, 1.0
    %v799 = vmul.f32 %v79, 2.0
    %v800 = vmul.f32 %v80, 2.0
    %v801 = vand.u32 2147483647, %v799
    %vm802 = vcmp.le.f32.partialorder %v801, 0.7853982
    %vm803 = vcmp.lt.s32.totalorder %v799, 0
    %v804 = vand.u32 %v799, 2139095040
    %v805 = vshrl.u32 %v804, 23
    %v806 = vsub.s32 %v805, 127
    %v807 = vand.u32 2147483647, %v799
    %v808 = vand.u32 %v807, 8388607
    %v809 = vor.u32 %v808, 8388608
    %v810 = vsub.s32 0, %v809
    %v811 = vadd.s32 %v806, 1
    %vm812 = vcmp.gt.s32.totalorder %v811, 0
    %v813 = vsel %vm812, %v811, 0
    %v814 = vshrl.u32 %v813, 5
    %v815 = vand.u32 %v813, 31
    %v816 = vsub.s32 32, %v815
    %v817 = vshrl.u32 683565275, %v816
    %v818 = vshll.u32 683565275, %v815
    %v819 = vshrl.u32 2475754826, %v816
    %v820 = vor.u32 %v818, %v819
    %v821 = vshll.u32 2475754826, %v815
    %v822 = vshrl.u32 2131351028, %v816
    %v823 = vor.u32 %v821, %v822
    %v824 = vshll.u32 2131351028, %v815
    %v825 = vshrl.u32 2102212464, %v816
    %v826 = vor.u32 %v824, %v825
    %v827 = vshll.u32 2102212464, %v815
    %v828 = vshrl.u32 920167782, %v816
    %v829 = vor.u32 %v827, %v828
    %v830 = vshll.u32 920167782, %v815
    %v831 = vshrl.u32 1326507024, %v816
    %v832 = vor.u32 %v830, %v831
    %vm833 = vcmp.lt.s32.totalorder %v814, 1
    %vm834 = vcmp.lt.s32.totalorder %v814, 2
    %vm835 = vcmp.lt.s32.totalorder %v814, 3
    %vm836 = vcmp.lt.s32.totalorder %v814, 4
    %v837 = vsel %vm833, %v817, %v820
    %v838 = vsel %vm836, %v826, 2102212464
    %v839 = vsel %vm835, %v823, %v838
    %v840 = vsel %vm834, %v837, %v839
    %v841 = vsel %vm833, %v820, %v823
    %v842 = vsel %vm836, %v829, 920167782
    %v843 = vsel %vm835, %v826, %v842
    %v844 = vsel %vm834, %v841, %v843
    %v845 = vsel %vm833, %v823, %v826
    %v846 = vsel %vm836, %v832, 1326507024
    %v847 = vsel %vm835, %v829, %v846
    %v848 = vsel %vm834, %v845, %v847
    %v849 = vshll.u32 %v809, 8
    %v850 = vand.u32 %v849, 65535
    %v851 = vshrl.u32 %v849, 16
    %v852 = vand.u32 %v848, 65535
    %v853 = vshrl.u32 %v848, 16
    %v854 = vmul.u32 %v850, %v852
    %v855 = vmul.u32 %v850, %v853
    %v856 = vmul.u32 %v851, %v852
    %v857 = vmul.u32 %v851, %v853
    %v858 = vshll.u32 %v855, 16
    %v859 = vshrl.u32 %v855, 16
    %v860 = vshll.u32 %v856, 16
    %v861 = vshrl.u32 %v856, 16
    %vm862 = vc.u32 %v854, %v858
    %v863 = vsel %vm862, 1, 0
    %v864 = vadd.s32 %v854, %v858
    %v865 = vadd.s32 %v857, %v863
    %vm866 = vc.u32 %v864, %v860
    %v867 = vsel %vm866, 1, 0
    %v868 = vadd.s32 %v864, %v860
    %v869 = vadd.s32 %v865, %v867
    %v870 = vadd.s32 %v869, %v859
    %v871 = vadd.s32 %v870, %v861
    %v872 = vand.u32 %v849, 65535
    %v873 = vshrl.u32 %v849, 16
    %v874 = vand.u32 %v844, 65535
    %v875 = vshrl.u32 %v844, 16
    %v876 = vmul.u32 %v872, %v874
    %v877 = vmul.u32 %v872, %v875
    %v878 = vmul.u32 %v873, %v874
    %v879 = vmul.u32 %v873, %v875
    %v880 = vshll.u32 %v877, 16
    %v881 = vshrl.u32 %v877, 16
    %v882 = vshll.u32 %v878, 16
    %v883 = vshrl.u32 %v878, 16
    %vm884 = vc.u32 %v876, %v880
    %v885 = vsel %vm884, 1, 0
    %v886 = vadd.s32 %v876, %v880
    %v887 = vadd.s32 %v879, %v885
    %vm888 = vc.u32 %v886, %v882
    %v889 = vsel %vm888, 1, 0
    %v890 = vadd.s32 %v886, %v882
    %v891 = vadd.s32 %v887, %v889
    %v892 = vadd.s32 %v891, %v881
    %v893 = vadd.s32 %v892, %v883
    %v894 = vmul.u32 %v849, %v840
    %v895 = vadd.s32 %v871, %v890
    %vm896 = vc.u32 %v871, %v890
    %v897 = vadd.s32 %v893, 1
    %v898 = vsel %vm896, %v897, %v893
    %v899 = vadd.s32 %v894, %v898
    %v900 = vadd.s32 %v899, 536870912
    %v901 = vshrl.u32 %v900, 30
    %v902 = vshll.u32 %v901, 30
    %v903 = vsub.s32 %v899, %v902
    %vm904 = vcmp.lt.s32.totalorder %v903, 0
    %v905 = vsub.s32 0, %v903
    %v906 = vsel %vm904, %v905, %v903
    %v907 = vclz %v906
    %v908 = vsub.s32 %v907, 2
    %vm909 = vcmp.gt.s32.totalorder 0, %v908
    %v910 = vsel %vm909, 0, %v908
    %v911 = vsub.s32 32, %v910
    %v912 = vshll.u32 %v903, %v910
    %v913 = vshrl.u32 %v895, %v911
    %v914 = vor.u32 %v912, %v913
    %v915 = vsub.s32 4294967266, %v910
    %v916 = vadd.s32 %v915, 127
    %v917 = vshll.u32 %v916, 23
    %v918 = vor.u32 4788187, %v917
    %v919 = vand.u32 2147483647, %v918
    %v921 = vcvt.s32.f32 %v914
    %v922 = vmul.f32 %v921, %v919
    %v923 = vxor.u32 %v922, 2147483648
    %v924 = vsel %vm803, %v923, %v922
    %v925 = vsub.s32 4, %v901
    %v926 = vsel %vm803, %v925, %v901
    %v927 = vsel %vm802, %v799, %v924
    %v928 = vsel %vm802, 0, %v926
    %v929 = vmul.f32 %v927, %v927
    %v930 = vmul.f32 %v929, -0.001358992
    %v931 = vadd.f32 %v930, 0.041655596
    %v932 = vmul.f32 %v929, %v931
    %v933 = vadd.f32 %v932, -0.4999988
    %v934 = vmul.f32 %v929, %v933
    %v935 = vadd.f32 1.0, %v934
    %v936 = vmul.f32 %v927, %v927
    %v937 = vmul.f32 %v936, -0.00019511016
    %v938 = vadd.f32 %v937, 0.008332121
    %v939 = vmul.f32 %v936, %v938
    %v940 = vadd.f32 %v939, -0.16666654
    %v941 = vmul.f32 %v936, %v940
    %v942 = vadd.f32 %v941, 1.0
    %v943 = vmul.f32 %v942, %v927
    %vm944 = vweird.f32 %v799
    %v945 = vand.u32 %v928, 3
    %vm946 = vcmp.lt.s32.totalorder %v945, 2
    %vm947 = vcmp.eq.s32.totalorder %v945, 0
    %v948 = vxor.u32 %v943, 2147483648
    %v949 = vsel %vm947, %v935, %v948
    %vm950 = vcmp.eq.s32.totalorder %v945, 2
    %v951 = vxor.u32 %v935, 2147483648
    %v952 = vsel %vm950, %v951, %v943
    %v953 = vsel %vm946, %v949, %v952
    %v954 = vsel %vm944, nan, %v953
    %v955 = vand.u32 2147483647, %v800
    %vm956 = vcmp.le.f32.partialorder %v955, 0.7853982
    %vm957 = vcmp.lt.s32.totalorder %v800, 0
    %v958 = vand.u32 %v800, 2139095040
    %v959 = vshrl.u32 %v958, 23
    %v960 = vsub.s32 %v959, 127
    %v961 = vand.u32 2147483647, %v800
    %v962 = vand.u32 %v961, 8388607
    %v963 = vor.u32 %v962, 8388608
    %v964 = vsub.s32 0, %v963
    %v965 = vadd.s32 %v960, 1
    %vm966 = vcmp.gt.s32.totalorder %v965, 0
    %v967 = vsel %vm966, %v965, 0
    %v968 = vshrl.u32 %v967, 5
    %v969 = vand.u32 %v967, 31
    %v970 = vsub.s32 32, %v969
    %v971 = vshrl.u32 683565275, %v970
    %v972 = vshll.u32 683565275, %v969
    %v973 = vshrl.u32 2475754826, %v970
    %v974 = vor.u32 %v972, %v973
    %v975 = vshll.u32 2475754826, %v969
    %v976 = vshrl.u32 2131351028, %v970
    %v977 = vor.u32 %v975, %v976
    %v978 = vshll.u32 2131351028, %v969
    %v979 = vshrl.u32 2102212464, %v970
    %v980 = vor.u32 %v978, %v979
    %v981 = vshll.u32 2102212464, %v969
    %v982 = vshrl.u32 920167782, %v970
    %v983 = vor.u32 %v981, %v982
    %v984 = vshll.u32 920167782, %v969
    %v985 = vshrl.u32 1326507024, %v970
    %v986 = vor.u32 %v984, %v985
    %vm987 = vcmp.lt.s32.totalorder %v968, 1
    %vm988 = vcmp.lt.s32.totalorder %v968, 2
    %vm989 = vcmp.lt.s32.totalorder %v968, 3
    %vm990 = vcmp.lt.s32.totalorder %v968, 4
    %v991 = vsel %vm987, %v971, %v974
    %v992 = vsel %vm990, %v980, 2102212464
    %v993 = vsel %vm989, %v977, %v992
    %v994 = vsel %vm988, %v991, %v993
    %v995 = vsel %vm987, %v974, %v977
    %v996 = vsel %vm990, %v983, 920167782
    %v997 = vsel %vm989, %v980, %v996
    %v998 = vsel %vm988, %v995, %v997
    %v999 = vsel %vm987, %v977, %v980
    %v1000 = vsel %vm990, %v986, 1326507024
    %v1001 = vsel %vm989, %v983, %v1000
    %v1002 = vsel %vm988, %v999, %v1001
    %v1003 = vshll.u32 %v963, 8
    %v1004 = vand.u32 %v1003, 65535
    %v1005 = vshrl.u32 %v1003, 16
    %v1006 = vand.u32 %v1002, 65535
    %v1007 = vshrl.u32 %v1002, 16
    %v1008 = vmul.u32 %v1004, %v1006
    %v1009 = vmul.u32 %v1004, %v1007
    %v1010 = vmul.u32 %v1005, %v1006
    %v1011 = vmul.u32 %v1005, %v1007
    %v1012 = vshll.u32 %v1009, 16
    %v1013 = vshrl.u32 %v1009, 16
    %v1014 = vshll.u32 %v1010, 16
    %v1015 = vshrl.u32 %v1010, 16
    %vm1016 = vc.u32 %v1008, %v1012
    %v1017 = vsel %vm1016, 1, 0
    %v1018 = vadd.s32 %v1008, %v1012
    %v1019 = vadd.s32 %v1011, %v1017
    %vm1020 = vc.u32 %v1018, %v1014
    %v1021 = vsel %vm1020, 1, 0
    %v1022 = vadd.s32 %v1018, %v1014
    %v1023 = vadd.s32 %v1019, %v1021
    %v1024 = vadd.s32 %v1023, %v1013
    %v1025 = vadd.s32 %v1024, %v1015
    %v1026 = vand.u32 %v1003, 65535
    %v1027 = vshrl.u32 %v1003, 16
    %v1028 = vand.u32 %v998, 65535
    %v1029 = vshrl.u32 %v998, 16
    %v1030 = vmul.u32 %v1026, %v1028
    %v1031 = vmul.u32 %v1026, %v1029
    %v1032 = vmul.u32 %v1027, %v1028
    %v1033 = vmul.u32 %v1027, %v1029
    %v1034 = vshll.u32 %v1031, 16
    %v1035 = vshrl.u32 %v1031, 16
    %v1036 = vshll.u32 %v1032, 16
    %v1037 = vshrl.u32 %v1032, 16
    %vm1038 = vc.u32 %v1030, %v1034
    %v1039 = vsel %vm1038, 1, 0
    %v1040 = vadd.s32 %v1030, %v1034
    %v1041 = vadd.s32 %v1033, %v1039
    %vm1042 = vc.u32 %v1040, %v1036
    %v1043 = vsel %vm1042, 1, 0
    %v1044 = vadd.s32 %v1040, %v1036
    %v1045 = vadd.s32 %v1041, %v1043
    %v1046 = vadd.s32 %v1045, %v1035
    %v1047 = vadd.s32 %v1046, %v1037
    %v1048 = vmul.u32 %v1003, %v994
    %v1049 = vadd.s32 %v1025, %v1044
    %vm1050 = vc.u32 %v1025, %v1044
    %v1051 = vadd.s32 %v1047, 1
    %v1052 = vsel %vm1050, %v1051, %v1047
    %v1053 = vadd.s32 %v1048, %v1052
    %v1054 = vadd.s32 %v1053, 536870912
    %v1055 = vshrl.u32 %v1054, 30
    %v1056 = vshll.u32 %v1055, 30
    %v1057 = vsub.s32 %v1053, %v1056
    %vm1058 = vcmp.lt.s32.totalorder %v1057, 0
    %v1059 = vsub.s32 0, %v1057
    %v1060 = vsel %vm1058, %v1059, %v1057
    %v1061 = vclz %v1060
    %v1062 = vsub.s32 %v1061, 2
    %vm1063 = vcmp.gt.s32.totalorder 0, %v1062
    %v1064 = vsel %vm1063, 0, %v1062
    %v1065 = vsub.s32 32, %v1064
    %v1066 = vshll.u32 %v1057, %v1064
    %v1067 = vshrl.u32 %v1049, %v1065
    %v1068 = vor.u32 %v1066, %v1067
    %v1069 = vsub.s32 4294967266, %v1064
    %v1070 = vadd.s32 %v1069, 127
    %v1071 = vshll.u32 %v1070, 23
    %v1072 = vor.u32 4788187, %v1071
    %v1073 = vand.u32 2147483647, %v1072
    %v1075 = vcvt.s32.f32 %v1068
    %v1076 = vmul.f32 %v1075, %v1073
    %v1077 = vxor.u32 %v1076, 2147483648
    %v1078 = vsel %vm957, %v1077, %v1076
    %v1079 = vsub.s32 4, %v1055
    %v1080 = vsel %vm957, %v1079, %v1055
    %v1081 = vsel %vm956, %v800, %v1078
    %v1082 = vsel %vm956, 0, %v1080
    %v1083 = vmul.f32 %v1081, %v1081
    %v1084 = vmul.f32 %v1083, -0.001358992
    %v1085 = vadd.f32 %v1084, 0.041655596
    %v1086 = vmul.f32 %v1083, %v1085
    %v1087 = vadd.f32 %v1086, -0.4999988
    %v1088 = vmul.f32 %v1083, %v1087
    %v1089 = vadd.f32 1.0, %v1088
    %v1090 = vmul.f32 %v1081, %v1081
    %v1091 = vmul.f32 %v1090, -0.00019511016
    %v1092 = vadd.f32 %v1091, 0.008332121
    %v1093 = vmul.f32 %v1090, %v1092
    %v1094 = vadd.f32 %v1093, -0.16666654
    %v1095 = vmul.f32 %v1090, %v1094
    %v1096 = vadd.f32 %v1095, 1.0
    %v1097 = vmul.f32 %v1096, %v1081
    %vm1098 = vweird.f32 %v800
    %v1099 = vand.u32 %v1082, 3
    %vm1100 = vcmp.lt.s32.totalorder %v1099, 2
    %vm1101 = vcmp.eq.s32.totalorder %v1099, 0
    %v1102 = vxor.u32 %v1097, 2147483648
    %v1103 = vsel %vm1101, %v1089, %v1102
    %vm1104 = vcmp.eq.s32.totalorder %v1099, 2
    %v1105 = vxor.u32 %v1089, 2147483648
    %v1106 = vsel %vm1104, %v1105, %v1097
    %v1107 = vsel %vm1100, %v1103, %v1106
    %v1108 = vsel %vm1098, nan, %v1107
    %v1109 = vand.u32 2147483647, %v799
    %vm1110 = vcmp.le.f32.partialorder %v1109, 0.7853982
    %vm1111 = vcmp.lt.s32.totalorder %v799, 0
    %v1112 = vand.u32 %v799, 2139095040
    %v1113 = vshrl.u32 %v1112, 23
    %v1114 = vsub.s32 %v1113, 127
    %v1115 = vand.u32 2147483647, %v799
    %v1116 = vand.u32 %v1115, 8388607
    %v1117 = vor.u32 %v1116, 8388608
    %v1118 = vsub.s32 0, %v1117
    %v1119 = vadd.s32 %v1114, 1
    %vm1120 = vcmp.gt.s32.totalorder %v1119, 0
    %v1121 = vsel %vm1120, %v1119, 0
    %v1122 = vshrl.u32 %v1121, 5
    %v1123 = vand.u32 %v1121, 31
    %v1124 = vsub.s32 32, %v1123
    %v1125 = vshrl.u32 683565275, %v1124
    %v1126 = vshll.u32 683565275, %v1123
    %v1127 = vshrl.u32 2475754826, %v1124
    %v1128 = vor.u32 %v1126, %v1127
    %v1129 = vshll.u32 2475754826, %v1123
    %v1130 = vshrl.u32 2131351028, %v1124
    %v1131 = vor.u32 %v1129, %v1130
    %v1132 = vshll.u32 2131351028, %v1123
    %v1133 = vshrl.u32 2102212464, %v1124
    %v1134 = vor.u32 %v1132, %v1133
    %v1135 = vshll.u32 2102212464, %v1123
    %v1136 = vshrl.u32 920167782, %v1124
    %v1137 = vor.u32 %v1135, %v1136
    %v1138 = vshll.u32 920167782, %v1123
    %v1139 = vshrl.u32 1326507024, %v1124
    %v1140 = vor.u32 %v1138, %v1139
    %vm1141 = vcmp.lt.s32.totalorder %v1122, 1
    %vm1142 = vcmp.lt.s32.totalorder %v1122, 2
    %vm1143 = vcmp.lt.s32.totalorder %v1122, 3
    %vm1144 = vcmp.lt.s32.totalorder %v1122, 4
    %v1145 = vsel %vm1141, %v1125, %v1128
    %v1146 = vsel %vm1144, %v1134, 2102212464
    %v1147 = vsel %vm1143, %v1131, %v1146
    %v1148 = vsel %vm1142, %v1145, %v1147
    %v1149 = vsel %vm1141, %v1128, %v1131
    %v1150 = vsel %vm1144, %v1137, 920167782
    %v1151 = vsel %vm1143, %v1134, %v1150
    %v1152 = vsel %vm1142, %v1149, %v1151
    %v1153 = vsel %vm1141, %v1131, %v1134
    %v1154 = vsel %vm1144, %v1140, 1326507024
    %v1155 = vsel %vm1143, %v1137, %v1154
    %v1156 = vsel %vm1142, %v1153, %v1155
    %v1157 = vshll.u32 %v1117, 8
    %v1158 = vand.u32 %v1157, 65535
    %v1159 = vshrl.u32 %v1157, 16
    %v1160 = vand.u32 %v1156, 65535
    %v1161 = vshrl.u32 %v1156, 16
    %v1162 = vmul.u32 %v1158, %v1160
    %v1163 = vmul.u32 %v1158, %v1161
    %v1164 = vmul.u32 %v1159, %v1160
    %v1165 = vmul.u32 %v1159, %v1161
    %v1166 = vshll.u32 %v1163, 16
    %v1167 = vshrl.u32 %v1163, 16
    %v1168 = vshll.u32 %v1164, 16
    %v1169 = vshrl.u32 %v1164, 16
    %vm1170 = vc.u32 %v1162, %v1166
    %v1171 = vsel %vm1170, 1, 0
    %v1172 = vadd.s32 %v1162, %v1166
    %v1173 = vadd.s32 %v1165, %v1171
    %vm1174 = vc.u32 %v1172, %v1168
    %v1175 = vsel %vm1174, 1, 0
    %v1176 = vadd.s32 %v1172, %v1168
    %v1177 = vadd.s32 %v1173, %v1175
    %v1178 = vadd.s32 %v1177, %v1167
    %v1179 = vadd.s32 %v1178, %v1169
    %v1180 = vand.u32 %v1157, 65535
    %v1181 = vshrl.u32 %v1157, 16
    %v1182 = vand.u32 %v1152, 65535
    %v1183 = vshrl.u32 %v1152, 16
    %v1184 = vmul.u32 %v1180, %v1182
    %v1185 = vmul.u32 %v1180, %v1183
    %v1186 = vmul.u32 %v1181, %v1182
    %v1187 = vmul.u32 %v1181, %v1183
    %v1188 = vshll.u32 %v1185, 16
    %v1189 = vshrl.u32 %v1185, 16
    %v1190 = vshll.u32 %v1186, 16
    %v1191 = vshrl.u32 %v1186, 16
    %vm1192 = vc.u32 %v1184, %v1188
    %v1193 = vsel %vm1192, 1, 0
    %v1194 = vadd.s32 %v1184, %v1188
    %v1195 = vadd.s32 %v1187, %v1193
    %vm1196 = vc.u32 %v1194, %v1190
    %v1197 = vsel %vm1196, 1, 0
    %v1198 = vadd.s32 %v1194, %v1190
    %v1199 = vadd.s32 %v1195, %v1197
    %v1200 = vadd.s32 %v1199, %v1189
    %v1201 = vadd.s32 %v1200, %v1191
    %v1202 = vmul.u32 %v1157, %v1148
    %v1203 = vadd.s32 %v1179, %v1198
    %vm1204 = vc.u32 %v1179, %v1198
    %v1205 = vadd.s32 %v1201, 1
    %v1206 = vsel %vm1204, %v1205, %v1201
    %v1207 = vadd.s32 %v1202, %v1206
    %v1208 = vadd.s32 %v1207, 536870912
    %v1209 = vshrl.u32 %v1208, 30
    %v1210 = vshll.u32 %v1209, 30
    %v1211 = vsub.s32 %v1207, %v1210
    %vm1212 = vcmp.lt.s32.totalorder %v1211, 0
    %v1213 = vsub.s32 0, %v1211
    %v1214 = vsel %vm1212, %v1213, %v1211
    %v1215 = vclz %v1214
    %v1216 = vsub.s32 %v1215, 2
    %vm1217 = vcmp.gt.s32.totalorder 0, %v1216
    %v1218 = vsel %vm1217, 0, %v1216
    %v1219 = vsub.s32 32, %v1218
    %v1220 = vshll.u32 %v1211, %v1218
    %v1221 = vshrl.u32 %v1203, %v1219
    %v1222 = vor.u32 %v1220, %v1221
    %v1223 = vsub.s32 4294967266, %v1218
    %v1224 = vadd.s32 %v1223, 127
    %v1225 = vshll.u32 %v1224, 23
    %v1226 = vor.u32 4788187, %v1225
    %v1227 = vand.u32 2147483647, %v1226
    %v1229 = vcvt.s32.f32 %v1222
    %v1230 = vmul.f32 %v1229, %v1227
    %v1231 = vxor.u32 %v1230, 2147483648
    %v1232 = vsel %vm1111, %v1231, %v1230
    %v1233 = vsub.s32 4, %v1209
    %v1234 = vsel %vm1111, %v1233, %v1209
    %v1235 = vsel %vm1110, %v799, %v1232
    %v1236 = vsel %vm1110, 0, %v1234
    %v1237 = vmul.f32 %v1235, %v1235
    %v1238 = vmul.f32 %v1237, -0.001358992
    %v1239 = vadd.f32 %v1238, 0.041655596
    %v1240 = vmul.f32 %v1237, %v1239
    %v1241 = vadd.f32 %v1240, -0.4999988
    %v1242 = vmul.f32 %v1237, %v1241
    %v1243 = vadd.f32 1.0, %v1242
    %v1244 = vmul.f32 %v1235, %v1235
    %v1245 = vmul.f32 %v1244, -0.00019511016
    %v1246 = vadd.f32 %v1245, 0.008332121
    %v1247 = vmul.f32 %v1244, %v1246
    %v1248 = vadd.f32 %v1247, -0.16666654
    %v1249 = vmul.f32 %v1244, %v1248
    %v1250 = vadd.f32 %v1249, 1.0
    %v1251 = vmul.f32 %v1250, %v1235
    %vm1252 = vweird.f32 %v799
    %v1253 = vadd.s32 %v1236, 3
    %v1254 = vand.u32 %v1253, 3
    %vm1255 = vcmp.lt.s32.totalorder %v1254, 2
    %vm1256 = vcmp.eq.s32.totalorder %v1254, 0
    %v1257 = vxor.u32 %v1251, 2147483648
    %v1258 = vsel %vm1256, %v1243, %v1257
    %vm1259 = vcmp.eq.s32.totalorder %v1254, 2
    %v1260 = vxor.u32 %v1243, 2147483648
    %v1261 = vsel %vm1259, %v1260, %v1251
    %v1262 = vsel %vm1255, %v1258, %v1261
    %v1263 = vsel %vm1252, nan, %v1262
    %v1264 = vand.u32 2147483647, %v800
    %vm1265 = vcmp.le.f32.partialorder %v1264, 0.7853982
    %vm1266 = vcmp.lt.s32.totalorder %v800, 0
    %v1267 = vand.u32 %v800, 2139095040
    %v1268 = vshrl.u32 %v1267, 23
    %v1269 = vsub.s32 %v1268, 127
    %v1270 = vand.u32 2147483647, %v800
    %v1271 = vand.u32 %v1270, 8388607
    %v1272 = vor.u32 %v1271, 8388608
    %v1273 = vsub.s32 0, %v1272
    %v1274 = vadd.s32 %v1269, 1
    %vm1275 = vcmp.gt.s32.totalorder %v1274, 0
    %v1276 = vsel %vm1275, %v1274, 0
    %v1277 = vshrl.u32 %v1276, 5
    %v1278 = vand.u32 %v1276, 31
    %v1279 = vsub.s32 32, %v1278
    %v1280 = vshrl.u32 683565275, %v1279
    %v1281 = vshll.u32 683565275, %v1278
    %v1282 = vshrl.u32 2475754826, %v1279
    %v1283 = vor.u32 %v1281, %v1282
    %v1284 = vshll.u32 2475754826, %v1278
    %v1285 = vshrl.u32 2131351028, %v1279
    %v1286 = vor.u32 %v1284, %v1285
    %v1287 = vshll.u32 2131351028, %v1278
    %v1288 = vshrl.u32 2102212464, %v1279
    %v1289 = vor.u32 %v1287, %v1288
    %v1290 = vshll.u32 2102212464, %v1278
    %v1291 = vshrl.u32 920167782, %v1279
    %v1292 = vor.u32 %v1290, %v1291
    %v1293 = vshll.u32 920167782, %v1278
    %v1294 = vshrl.u32 1326507024, %v1279
    %v1295 = vor.u32 %v1293, %v1294
    %vm1296 = vcmp.lt.s32.totalorder %v1277, 1
    %vm1297 = vcmp.lt.s32.totalorder %v1277, 2
    %vm1298 = vcmp.lt.s32.totalorder %v1277, 3
    %vm1299 = vcmp.lt.s32.totalorder %v1277, 4
    %v1300 = vsel %vm1296, %v1280, %v1283
    %v1301 = vsel %vm1299, %v1289, 2102212464
    %v1302 = vsel %vm1298, %v1286, %v1301
    %v1303 = vsel %vm1297, %v1300, %v1302
    %v1304 = vsel %vm1296, %v1283, %v1286
    %v1305 = vsel %vm1299, %v1292, 920167782
    %v1306 = vsel %vm1298, %v1289, %v1305
    %v1307 = vsel %vm1297, %v1304, %v1306
    %v1308 = vsel %vm1296, %v1286, %v1289
    %v1309 = vsel %vm1299, %v1295, 1326507024
    %v1310 = vsel %vm1298, %v1292, %v1309
    %v1311 = vsel %vm1297, %v1308, %v1310
    %v1312 = vshll.u32 %v1272, 8
    %v1313 = vand.u32 %v1312, 65535
    %v1314 = vshrl.u32 %v1312, 16
    %v1315 = vand.u32 %v1311, 65535
    %v1316 = vshrl.u32 %v1311, 16
    %v1317 = vmul.u32 %v1313, %v1315
    %v1318 = vmul.u32 %v1313, %v1316
    %v1319 = vmul.u32 %v1314, %v1315
    %v1320 = vmul.u32 %v1314, %v1316
    %v1321 = vshll.u32 %v1318, 16
    %v1322 = vshrl.u32 %v1318, 16
    %v1323 = vshll.u32 %v1319, 16
    %v1324 = vshrl.u32 %v1319, 16
    %vm1325 = vc.u32 %v1317, %v1321
    %v1326 = vsel %vm1325, 1, 0
    %v1327 = vadd.s32 %v1317, %v1321
    %v1328 = vadd.s32 %v1320, %v1326
    %vm1329 = vc.u32 %v1327, %v1323
    %v1330 = vsel %vm1329, 1, 0
    %v1331 = vadd.s32 %v1327, %v1323
    %v1332 = vadd.s32 %v1328, %v1330
    %v1333 = vadd.s32 %v1332, %v1322
    %v1334 = vadd.s32 %v1333, %v1324
    %v1335 = vand.u32 %v1312, 65535
    %v1336 = vshrl.u32 %v1312, 16
    %v1337 = vand.u32 %v1307, 65535
    %v1338 = vshrl.u32 %v1307, 16
    %v1339 = vmul.u32 %v1335, %v1337
    %v1340 = vmul.u32 %v1335, %v1338
    %v1341 = vmul.u32 %v1336, %v1337
    %v1342 = vmul.u32 %v1336, %v1338
    %v1343 = vshll.u32 %v1340, 16
    %v1344 = vshrl.u32 %v1340, 16
    %v1345 = vshll.u32 %v1341, 16
    %v1346 = vshrl.u32 %v1341, 16
    %vm1347 = vc.u32 %v1339, %v1343
    %v1348 = vsel %vm1347, 1, 0
    %v1349 = vadd.s32 %v1339, %v1343
    %v1350 = vadd.s32 %v1342, %v1348
    %vm1351 = vc.u32 %v1349, %v1345
    %v1352 = vsel %vm1351, 1, 0
    %v1353 = vadd.s32 %v1349, %v1345
    %v1354 = vadd.s32 %v1350, %v1352
    %v1355 = vadd.s32 %v1354, %v1344
    %v1356 = vadd.s32 %v1355, %v1346
    %v1357 = vmul.u32 %v1312, %v1303
    %v1358 = vadd.s32 %v1334, %v1353
    %vm1359 = vc.u32 %v1334, %v1353
    %v1360 = vadd.s32 %v1356, 1
    %v1361 = vsel %vm1359, %v1360, %v1356
    %v1362 = vadd.s32 %v1357, %v1361
    %v1363 = vadd.s32 %v1362, 536870912
    %v1364 = vshrl.u32 %v1363, 30
    %v1365 = vshll.u32 %v1364, 30
    %v1366 = vsub.s32 %v1362, %v1365
    %vm1367 = vcmp.lt.s32.totalorder %v1366, 0
    %v1368 = vsub.s32 0, %v1366
    %v1369 = vsel %vm1367, %v1368, %v1366
    %v1370 = vclz %v1369
    %v1371 = vsub.s32 %v1370, 2
    %vm1372 = vcmp.gt.s32.totalorder 0, %v1371
    %v1373 = vsel %vm1372, 0, %v1371
    %v1374 = vsub.s32 32, %v1373
    %v1375 = vshll.u32 %v1366, %v1373
    %v1376 = vshrl.u32 %v1358, %v1374
    %v1377 = vor.u32 %v1375, %v1376
    %v1378 = vsub.s32 4294967266, %v1373
    %v1379 = vadd.s32 %v1378, 127
    %v1380 = vshll.u32 %v1379, 23
    %v1381 = vor.u32 4788187, %v1380
    %v1382 = vand.u32 2147483647, %v1381
    %v1384 = vcvt.s32.f32 %v1377
    %v1385 = vmul.f32 %v1384, %v1382
    %v1386 = vxor.u32 %v1385, 2147483648
    %v1387 = vsel %vm1266, %v1386, %v1385
    %v1388 = vsub.s32 4, %v1364
    %v1389 = vsel %vm1266, %v1388, %v1364
    %v1390 = vsel %vm1265, %v800, %v1387
    %v1391 = vsel %vm1265, 0, %v1389
    %v1392 = vmul.f32 %v1390, %v1390
    %v1393 = vmul.f32 %v1392, -0.001358992
    %v1394 = vadd.f32 %v1393, 0.041655596
    %v1395 = vmul.f32 %v1392, %v1394
    %v1396 = vadd.f32 %v1395, -0.4999988
    %v1397 = vmul.f32 %v1392, %v1396
    %v1398 = vadd.f32 1.0, %v1397
    %v1399 = vmul.f32 %v1390, %v1390
    %v1400 = vmul.f32 %v1399, -0.00019511016
    %v1401 = vadd.f32 %v1400, 0.008332121
    %v1402 = vmul.f32 %v1399, %v1401
    %v1403 = vadd.f32 %v1402, -0.16666654
    %v1404 = vmul.f32 %v1399, %v1403
    %v1405 = vadd.f32 %v1404, 1.0
    %v1406 = vmul.f32 %v1405, %v1390
    %vm1407 = vweird.f32 %v800
    %v1408 = vadd.s32 %v1391, 3
    %v1409 = vand.u32 %v1408, 3
    %vm1410 = vcmp.lt.s32.totalorder %v1409, 2
    %vm1411 = vcmp.eq.s32.totalorder %v1409, 0
    %v1412 = vxor.u32 %v1406, 2147483648
    %v1413 = vsel %vm1411, %v1398, %v1412
    %vm1414 = vcmp.eq.s32.totalorder %v1409, 2
    %v1415 = vxor.u32 %v1398, 2147483648
    %v1416 = vsel %vm1414, %v1415, %v1406
    %v1417 = vsel %vm1410, %v1413, %v1416
    %v1418 = vsel %vm1407, nan, %v1417
    %v1419 = vmul.f32 %v954, %v795
    %v1420 = vmul.f32 %v1108, %v796
    %v1421 = vadd.f32 %v797, %v1419
    %v1422 = vadd.f32 %v798, %v1420
    %v1423 = vrcp.pop %v1421
    %v1424 = vrcp.pop %v1422
    %v1425 = vmul.f32 %v791, 2.0
    %v1426 = vmul.f32 %v792, 2.0
    %v1427 = vmul.f32 %v1425, %v1423
    %v1428 = vmul.f32 %v1426, %v1424
    %v1429 = vmul.f32 %v1263, %v795
    %v1430 = vmul.f32 %v1418, %v796
    %v1431 = vmul.f32 %v1429, %v1423
    %v1432 = vmul.f32 %v1430, %v1424
    %v1433 = vstv %s34
    %v1434 = vmul.f32 %v1433, %v1427
    %v1435 = vmul.f32 %v1433, %v1428
    %v1436 = vstv %s35
    %v1437 = vmul.f32 %v1436, %v1431
    %v1438 = vmul.f32 %v1436, %v1432
    %v1439 = vsub.f32 %v1434, %v1437
    %v1440 = vsub.f32 %v1435, %v1438
    %v1441 = vmul.f32 %v1433, %v1431
    %v1442 = vmul.f32 %v1433, %v1432
    %v1443 = vmul.f32 %v1436, %v1427
    %v1444 = vmul.f32 %v1436, %v1428
    %v1445 = vadd.f32 %v1441, %v1443
    %v1446 = vadd.f32 %v1442, %v1444
    %v1447 = vadd.f32 %v1439, 1.0
    %v1448 = vadd.f32 %v1440, 1.0
    %v1449 = vmul.f32 %v77, %v1447
    %v1450 = vmul.f32 %v78, %v1448
    %v1451 = vmul.f32 %v79, %v1445
    %v1452 = vmul.f32 %v80, %v1446
    %v1453 = vsub.f32 %v1449, %v1451
    %v1454 = vsub.f32 %v1450, %v1452
    %v1455 = vmul.f32 %v77, %v1445
    %v1456 = vmul.f32 %v78, %v1446
    %v1457 = vmul.f32 %v79, %v1447
    %v1458 = vmul.f32 %v80, %v1448
    %v1459 = vadd.f32 %v1455, %v1457
    %v1460 = vadd.f32 %v1456, %v1458
    %v1461 = vadd.f32 %v1453, %v783
    %v1462 = vadd.f32 %v1454, %v784
    %v1463 = vadd.f32 %v1459, %v789
    %v1464 = vadd.f32 %v1460, %v790
    %v1465 = vmul.f32 %v1461, %v1461
    %v1466 = vmul.f32 %v1462, %v1462
    %v1467 = vmul.f32 %v1463, %v1463
    %v1468 = vmul.f32 %v1464, %v1464
    %v1469 = vadd.f32 %v1465, %v1467
    %v1470 = vadd.f32 %v1466, %v1468
    %vm1471 = vcmp.gt.f32.partialorder %v1469, 0.0
    %vm1472 = vcmp.gt.f32.partialorder %v1470, 0.0
    %v1473 = vsel %vm1471, %v1469, 1.0
    %v1474 = vsel %vm1472, %v1470, 1.0
    %v1475 = vrsqrt.pop %v1473
    %v1476 = vmul.f32 %v1475, %v1473
    %v1477 = vmul.f32 %v1476, %v1475
    %v1478 = vmul.f32 0.5, %v1477
    %v1479 = vsub.f32 1.5, %v1478
    %v1480 = vmul.f32 %v1475, %v1479
    %vm1481 = vweird.f32 %v1473
    %vm1482 = vweird.f32 %v1475
    %vm1483 = vmor %vm1481, %vm1482
    %v1484 = vsel %vm1483, %v1475, %v1480
    %v1485 = vrsqrt.pop %v1474
    %v1486 = vmul.f32 %v1485, %v1474
    %v1487 = vmul.f32 %v1486, %v1485
    %v1488 = vmul.f32 0.5, %v1487
    %v1489 = vsub.f32 1.5, %v1488
    %v1490 = vmul.f32 %v1485, %v1489
    %vm1491 = vweird.f32 %v1474
    %vm1492 = vweird.f32 %v1485
    %vm1493 = vmor %vm1491, %vm1492
    %v1494 = vsel %vm1493, %v1485, %v1490
    %v1495 = vmul.f32 %v1469, %v1484
    %v1496 = vmul.f32 %v1470, %v1494
    %v1497 = vtanh.pop %v1495
    %v1498 = vtanh.pop %v1496
    %v1499 = vmul.f32 %v1497, %v1484
    %v1500 = vmul.f32 %v1498, %v1494
    %v1501 = vmul.f32 %v1499, %v1461
    %v1502 = vmul.f32 %v1500, %v1462
    %v1503 = vmul.f32 %v1499, %v1463
    %v1504 = vmul.f32 %v1500, %v1464
    %1505 = vst [vmem:[%s2] sm:$0xff] %v1501
    %1506 = vst [vmem:[%s2 + $0x8] sm:$0xff] %v1502
    %s1507 = scalar_lea.vmem %s2, 16
    %1508 = vst [vmem:[%s1507] sm:$0xff] %v1503
    %1509 = vst [vmem:[%s1507 + $0x8] sm:$0xff] %v1504
    // Predicated region
    $region14: #{optaeg_v3.1} parent=1 // pred_check
      _
    $region15: #{optaeg_v3.1} parent=1 // pred_check_branch
      %1511 = sbr.rel (0) target = $region17
    $region16: #{optaeg_v3.1} parent=1 // pred_region
      _
    $region17: #{optaeg_v3.1} parent=1 // pred_fallthru
      _
    // Predicated region
    $region18: #{optaeg_v3.1} parent=1 // pred_check
      _
    $region19: #{optaeg_v3.1} parent=1 // pred_check_branch
      %1513 = sbr.rel (0) target = $region21
    $region20: #{optaeg_v3.1} parent=1 // pred_region
      _
    $region21: #{optaeg_v3.1} parent=1 // pred_fallthru
      _
    %1514 = vsyncpa [#allocation3], 1

</llo_original>
